<compile_context>
chip_gen: v5e
topology: v5e:2x2
jax: 0.10.0
libtpu: 0.0.40
codegen_flags: <defaults>
</compile_context>

<pallas_src>
import functools
import math

import numpy as np
import jax
import jax.numpy as jnp
from jax.experimental import pallas as pl
from jax.experimental.pallas import tpu as pltpu


def _gaussian_1d(window_size: int, sigma: float = 1.5) -> np.ndarray:
    # Matches SSIM.gaussian: normalized 1D Gaussian, window center at size//2.
    g = np.array(
        [math.exp(-((x - window_size // 2) ** 2) / (2.0 * sigma ** 2))
         for x in range(window_size)],
        dtype=np.float64,
    )
    return (g / g.sum()).astype(np.float32)


def _band_matrix(n: int, gauss: np.ndarray) -> np.ndarray:
    """Banded matrix B with B[i, j] = gauss[j - i + pad]; B @ x == 1-D 'same'
    zero-padded cross-correlation of x along its leading axis."""
    win = gauss.shape[0]
    pad = win // 2
    m = np.zeros((n, n), dtype=np.float32)
    for i in range(n):
        for k in range(win):
            j = i + k - pad
            if 0 <= j < n:
                m[i, j] = gauss[k]
    return m


def _vmem_capacity_bytes() -> int:
    """Best-effort physical VMEM per TensorCore (falls back to 128 MiB)."""
    try:
        return int(pltpu.get_tpu_info().vmem_capacity_bytes)
    except Exception:  # pragma: no cover - conservative fallback
        return 128 * 1024 * 1024


def _choose_channels_per_block(nc: int, h: int, w: int, in_itemsize: int,
                               vmem_cap: int) -> int:
    """Largest channel block that fits the real per-channel live set."""
    weights = 2 * (h * h + w * w) * 4               # resident band matrices
    budget = max(int(vmem_cap * 0.7) - weights, h * w * 64)
    # Peak live f32 maps per channel: 5 stacked conv inputs + 5 pass results
    # live across each matmul (~10), plus elementwise temporaries and the
    # double-buffered input blocks.
    per_channel = h * w * (12 * 4 + 4 * in_itemsize)
    cap = max(1, budget // per_channel)
    divisors = [d for d in range(1, nc + 1) if nc % d == 0]
    fitting = [d for d in divisors if d <= cap]
    if not fitting:
        # TODO(synk): row-tiled halo path for images where even one channel
        # exceeds the VMEM budget (large images on v7x).
        return 1
    if vmem_cap <= (80 << 20):
        # v7x-like (64 MiB / TensorCore): prefer an even number of grid steps
        # so the "parallel" channel axis splits evenly over 2 TensorCores.
        even = [d for d in fitting if (nc // d) % 2 == 0]
        if even:
            return max(even)
    # Single-TensorCore chips (v5e/v6e): extra grid steps are pure pipeline
    # overhead, so take the largest block that fits.
    return max(fitting)


def _ssim_kernel(ghr_ref, gvr_ref, x_ref, y_ref, out_ref, *, cb, h, w):
    # ghr_ref: (W, W) right-multiplier for the horizontal 'same' conv.
    # gvr_ref: (H, H) right-multiplier for the vertical conv (applied to the
    #          minor-transposed intermediate).
    # x_ref / y_ref: (cb, H, W) channel blocks (original dtype).
    # out_ref: (1, 1, cb) per-channel means of the SSIM map (lane-dense).
    ghr = ghr_ref[...]
    gvr = gvr_ref[...]
    x = x_ref[...].astype(jnp.float32)                 # (cb, H, W)
    y = y_ref[...].astype(jnp.float32)

    m = 5 * cb
    # Stack all five conv inputs along the channel axis so each separable
    # pass is ONE large MXU matmul (weights pushed into the MXU once).
    p5 = jnp.concatenate([x, y, x * x, y * y, x * y], axis=0)     # (5cb, H, W)

    # Horizontal pass: fold (channel, row) into M.  (5cb*H, W) @ (W, W).
    th = jnp.dot(p5.reshape(m * h, w), ghr,
                 preferred_element_type=jnp.float32).reshape(m, h, w)
    # Vertical pass: one minor-dims swap (XLU) so rows become the minor axis,
    # then fold (channel, col) into M.  (5cb*W, H) @ (H, H).
    tht = jnp.swapaxes(th, 1, 2)                                   # (5cb, W, H)
    conv = jnp.dot(tht.reshape(m * w, h), gvr,
                   preferred_element_type=jnp.float32).reshape(m, w, h)

    # Downstream math stays in the (channel, W, H) layout; only outer-dim
    # slices are needed to split the five stacked conv results.
    mu1 = conv[0 * cb:1 * cb]
    mu2 = conv[1 * cb:2 * cb]
    x2c = conv[2 * cb:3 * cb]
    y2c = conv[3 * cb:4 * cb]
    xyc = conv[4 * cb:5 * cb]

    mu1_sq = mu1 * mu1
    mu2_sq = mu2 * mu2
    mu1_mu2 = mu1 * mu2
    sigma1_sq = x2c - mu1_sq
    sigma2_sq = y2c - mu2_sq
    sigma12 = xyc - mu1_mu2

    c1 = 0.01 ** 2
    c2 = 0.03 ** 2
    numer = (2.0 * mu1_mu2 + c1) * (2.0 * sigma12 + c2)
    denom = (mu1_sq + mu2_sq + c1) * (sigma1_sq + sigma2_sq + c2)
    # Divide on the EUP: approximate reciprocal + one Newton refinement step.
    r = pl.reciprocal(denom, approx=True)
    r = r * (2.0 - denom * r)
    ssim_map = numer * r                                           # (cb, W, H)

    # Reduce sublane axis first, the lane axis last on the small (cb, H) slab.
    means = jnp.sum(jnp.sum(ssim_map, axis=1), axis=-1) * (1.0 / (h * w))
    out_ref[...] = means.reshape(1, 1, cb)


def ssim_pallas(img1, img2, window_size: int = 11, mean_flag: bool = True):
    """SSIM of two NCHW images, matching the PyTorch module semantics."""
    assert img1.shape == img2.shape and img1.ndim == 4
    N, C, H, W = img1.shape
    nc = N * C
    gauss = _gaussian_1d(window_size, 1.5)
    # Right-multiplier band matrices: 'same' zero-padded cross-correlation
    # along the minor axis is  x @ B.T  with  B[i, j] = gauss[j - i + pad].
    ghr = jnp.asarray(_band_matrix(W, gauss).T)        # (W, W)
    gvr = jnp.asarray(_band_matrix(H, gauss).T)        # (H, H)

    in_itemsize = jnp.dtype(img1.dtype).itemsize
    vmem_cap = _vmem_capacity_bytes()
    cb = _choose_channels_per_block(nc, H, W, in_itemsize, vmem_cap)
    g = nc // cb

    # Free metadata reshape only; no host-side pad / upcast / transpose.
    x = img1.reshape(nc, H, W)
    y = img2.reshape(nc, H, W)

    kernel = functools.partial(_ssim_kernel, cb=cb, h=H, w=W)

    est_vmem = (
        2 * (H * H + W * W) * 4                # resident band matrices
        + 2 * 2 * cb * H * W * in_itemsize     # double-buffered x, y blocks
        + 12 * cb * H * W * 4                  # peak f32 temporaries
    )
    vmem_limit = int(min(max(2 * est_vmem, 16 << 20), int(vmem_cap * 0.8)))

    per_channel = pl.pallas_call(
        kernel,
        out_shape=jax.ShapeDtypeStruct((g, 1, cb), jnp.float32),
        grid=(g,),
        in_specs=[
            pl.BlockSpec((W, W), lambda i: (0, 0)),        # Ghr (resident)
            pl.BlockSpec((H, H), lambda i: (0, 0)),        # Gvr (resident)
            pl.BlockSpec((cb, H, W), lambda i: (i, 0, 0)),
            pl.BlockSpec((cb, H, W), lambda i: (i, 0, 0)),
        ],
        out_specs=pl.BlockSpec((1, 1, cb), lambda i: (i, 0, 0)),
        compiler_params=pltpu.CompilerParams(
            dimension_semantics=("parallel",),
            vmem_limit_bytes=vmem_limit,
        ),
    )(ghr, gvr, x, y)

    per_channel = per_channel.reshape(N, C)
    if mean_flag:
        # Every channel has H*W elements, so the mean of per-channel means
        # equals ssim_map.mean().
        return jnp.mean(per_channel)
    # torch.mean(ssim_map, dim=(1, 2, 3)) -> shape (N,)
    return jnp.mean(per_channel, axis=1)


def _ssim_reference(img1, img2, window_size: int = 11, mean_flag: bool = True):
    """Pure-JAX reference (depthwise conv via lax) for a sanity check."""
    N, C, H, W = img1.shape
    pad = window_size // 2
    gnp = _gaussian_1d(window_size, 1.5)
    g1d = jnp.asarray(gnp)
    w2d = jnp.outer(g1d, g1d)                                 # (ws, ws)
    wk = jnp.broadcast_to(w2d, (C, 1, window_size, window_size))

    x1 = img1.astype(jnp.float32)
    x2 = img2.astype(jnp.float32)

    def dwconv(x):
        return jax.lax.conv_general_dilated(
            x, wk, window_strides=(1, 1), padding=[(pad, pad), (pad, pad)],
            dimension_numbers=("NCHW", "OIHW", "NCHW"), feature_group_count=C)

    mu1 = dwconv(x1)
    mu2 = dwconv(x2)
    mu1_sq, mu2_sq, mu1_mu2 = mu1 * mu1, mu2 * mu2, mu1 * mu2
    sigma1_sq = dwconv(x1 * x1) - mu1_sq
    sigma2_sq = dwconv(x2 * x2) - mu2_sq
    sigma12 = dwconv(x1 * x2) - mu1_mu2
    C1, C2 = 0.01 ** 2, 0.03 ** 2
    ssim_map = ((2 * mu1_mu2 + C1) * (2 * sigma12 + C2)) / (
        (mu1_sq + mu2_sq + C1) * (sigma1_sq + sigma2_sq + C2))
    if mean_flag:
        return jnp.mean(ssim_map)
    return jnp.mean(ssim_map, axis=(1, 2, 3))


if __name__ == "__main__":
    key = jax.random.PRNGKey(0)
    k1, k2 = jax.random.split(key)
    N, C, H, W = 2, 4, 16, 16
    img1 = jax.random.uniform(k1, (N, C, H, W), dtype=jnp.float32)
    img2 = jax.random.uniform(k2, (N, C, H, W), dtype=jnp.float32)

    out_mean = jax.block_until_ready(ssim_pallas(img1, img2, mean_flag=True))
    out_per_sample = jax.block_until_ready(ssim_pallas(img1, img2, mean_flag=False))

    ref_mean = jax.block_until_ready(_ssim_reference(img1, img2, mean_flag=True))
    ref_per_sample = jax.block_until_ready(_ssim_reference(img1, img2, mean_flag=False))

    assert out_per_sample.shape == (N,)
    assert jnp.allclose(out_mean, ref_mean, atol=1e-3), (out_mean, ref_mean)
    assert jnp.allclose(out_per_sample, ref_per_sample, atol=1e-3), (
        out_per_sample, ref_per_sample)

    print("KERNEL_OK")
</pallas_src>

<mosaic_0001>
module attributes {stable_mosaic.version = 11 : i64} {
  func.func @_ssim_kernel(%arg0: i32, %arg1: memref<16x16xf32, #tpu.memory_space<vmem>>, %arg2: memref<16x16xf32, #tpu.memory_space<vmem>>, %arg3: memref<8x16x16xf32, #tpu.memory_space<vmem>>, %arg4: memref<8x16x16xf32, #tpu.memory_space<vmem>>, %arg5: memref<1x1x8xf32, #tpu.memory_space<vmem>>) attributes {dimension_semantics = [#tpu.dimension_semantics<parallel>], iteration_bounds = array<i64: 1>, scalar_prefetch = 0 : i64, scratch_operands = 0 : i64, tpu.core_type = #tpu.core_type<tc>, window_params = [{pipeline_mode = #tpu.pipeline_mode<synchronous>, transform_indices = @transform_0, window_bounds = array<i64: 16, 16>}, {pipeline_mode = #tpu.pipeline_mode<synchronous>, transform_indices = @transform_1, window_bounds = array<i64: 16, 16>}, {transform_indices = @transform_2, window_bounds = array<i64: 8, 16, 16>}, {transform_indices = @transform_3, window_bounds = array<i64: 8, 16, 16>}, {transform_indices = @transform_4, window_bounds = array<i64: 1, 1, 8>}]} {
    %c0 = arith.constant 0 : index
    %c0_0 = arith.constant 0 : index
    %0 = vector.load %arg1[%c0, %c0_0] : memref<16x16xf32, #tpu.memory_space<vmem>>, vector<16x16xf32>
    %c0_1 = arith.constant 0 : index
    %c0_2 = arith.constant 0 : index
    %1 = vector.load %arg2[%c0_1, %c0_2] : memref<16x16xf32, #tpu.memory_space<vmem>>, vector<16x16xf32>
    %c0_3 = arith.constant 0 : index
    %c0_4 = arith.constant 0 : index
    %c0_5 = arith.constant 0 : index
    %2 = vector.load %arg3[%c0_3, %c0_4, %c0_5] : memref<8x16x16xf32, #tpu.memory_space<vmem>>, vector<8x16x16xf32>
    %c0_6 = arith.constant 0 : index
    %c0_7 = arith.constant 0 : index
    %c0_8 = arith.constant 0 : index
    %3 = vector.load %arg4[%c0_6, %c0_7, %c0_8] : memref<8x16x16xf32, #tpu.memory_space<vmem>>, vector<8x16x16xf32>
    %4 = arith.mulf %2, %2 : vector<8x16x16xf32>
    %5 = arith.mulf %3, %3 : vector<8x16x16xf32>
    %6 = arith.mulf %2, %3 : vector<8x16x16xf32>
    %7 = tpu.concatenate %2, %3, %4, %5, %6 in 0 : vector<8x16x16xf32>, vector<8x16x16xf32>, vector<8x16x16xf32>, vector<8x16x16xf32>, vector<8x16x16xf32> -> vector<40x16x16xf32>
    %8 = vector.shape_cast %7 : vector<40x16x16xf32> to vector<640x16xf32>
    %cst = arith.constant dense<0.000000e+00> : vector<640x16xf32>
    %9 = tpu.matmul %8, %0, %cst {dimension_numbers = #tpu.dot_dimension_numbers<[1], [0], [0], [1], [0, 0, 1, 1], [], []>} : vector<640x16xf32>, vector<16x16xf32>, vector<640x16xf32> -> vector<640x16xf32>
    %10 = vector.shape_cast %9 : vector<640x16xf32> to vector<40x16x16xf32>
    %11 = tpu.transpose %10, [0, 2, 1] : vector<40x16x16xf32> -> vector<40x16x16xf32>
    %12 = vector.shape_cast %11 : vector<40x16x16xf32> to vector<640x16xf32>
    %cst_9 = arith.constant dense<0.000000e+00> : vector<640x16xf32>
    %13 = tpu.matmul %12, %1, %cst_9 {dimension_numbers = #tpu.dot_dimension_numbers<[1], [0], [0], [1], [0, 0, 1, 1], [], []>} : vector<640x16xf32>, vector<16x16xf32>, vector<640x16xf32> -> vector<640x16xf32>
    %14 = vector.shape_cast %13 : vector<640x16xf32> to vector<40x16x16xf32>
    %15 = vector.extract_strided_slice %14 {offsets = [0, 0, 0], sizes = [8, 16, 16], strides = [1, 1, 1]} : vector<40x16x16xf32> to vector<8x16x16xf32>
    %16 = vector.extract_strided_slice %14 {offsets = [8, 0, 0], sizes = [8, 16, 16], strides = [1, 1, 1]} : vector<40x16x16xf32> to vector<8x16x16xf32>
    %17 = vector.extract_strided_slice %14 {offsets = [16, 0, 0], sizes = [8, 16, 16], strides = [1, 1, 1]} : vector<40x16x16xf32> to vector<8x16x16xf32>
    %18 = vector.extract_strided_slice %14 {offsets = [24, 0, 0], sizes = [8, 16, 16], strides = [1, 1, 1]} : vector<40x16x16xf32> to vector<8x16x16xf32>
    %19 = vector.extract_strided_slice %14 {offsets = [32, 0, 0], sizes = [8, 16, 16], strides = [1, 1, 1]} : vector<40x16x16xf32> to vector<8x16x16xf32>
    %20 = arith.mulf %15, %15 : vector<8x16x16xf32>
    %21 = arith.mulf %16, %16 : vector<8x16x16xf32>
    %22 = arith.mulf %15, %16 : vector<8x16x16xf32>
    %23 = arith.subf %17, %20 : vector<8x16x16xf32>
    %24 = arith.subf %18, %21 : vector<8x16x16xf32>
    %25 = arith.subf %19, %22 : vector<8x16x16xf32>
    %cst_10 = arith.constant 2.000000e+00 : f32
    %26 = vector.broadcast %cst_10 : f32 to vector<8x16x16xf32>
    %27 = arith.mulf %26, %22 : vector<8x16x16xf32>
    %cst_11 = arith.constant 9.99999974E-5 : f32
    %28 = vector.broadcast %cst_11 : f32 to vector<8x16x16xf32>
    %29 = arith.addf %27, %28 : vector<8x16x16xf32>
    %cst_12 = arith.constant 2.000000e+00 : f32
    %30 = vector.broadcast %cst_12 : f32 to vector<8x16x16xf32>
    %31 = arith.mulf %30, %25 : vector<8x16x16xf32>
    %cst_13 = arith.constant 8.99999984E-4 : f32
    %32 = vector.broadcast %cst_13 : f32 to vector<8x16x16xf32>
    %33 = arith.addf %31, %32 : vector<8x16x16xf32>
    %34 = arith.mulf %29, %33 : vector<8x16x16xf32>
    %35 = arith.addf %20, %21 : vector<8x16x16xf32>
    %cst_14 = arith.constant 9.99999974E-5 : f32
    %36 = vector.broadcast %cst_14 : f32 to vector<8x16x16xf32>
    %37 = arith.addf %35, %36 : vector<8x16x16xf32>
    %38 = arith.addf %23, %24 : vector<8x16x16xf32>
    %cst_15 = arith.constant 8.99999984E-4 : f32
    %39 = vector.broadcast %cst_15 : f32 to vector<8x16x16xf32>
    %40 = arith.addf %38, %39 : vector<8x16x16xf32>
    %41 = arith.mulf %37, %40 : vector<8x16x16xf32>
    %42 = tpu.reciprocal %41 {approx = true} : vector<8x16x16xf32> -> vector<8x16x16xf32>
    %43 = arith.mulf %41, %42 : vector<8x16x16xf32>
    %cst_16 = arith.constant 2.000000e+00 : f32
    %44 = vector.broadcast %cst_16 : f32 to vector<8x16x16xf32>
    %45 = arith.subf %44, %43 : vector<8x16x16xf32>
    %46 = arith.mulf %42, %45 : vector<8x16x16xf32>
    %47 = arith.mulf %34, %46 : vector<8x16x16xf32>
    %cst_17 = arith.constant dense<0.000000e+00> : vector<8x16xf32>
    %48 = vector.multi_reduction <add>, %47, %cst_17 [1] : vector<8x16x16xf32> to vector<8x16xf32>
    %cst_18 = arith.constant dense<0.000000e+00> : vector<8xf32>
    %49 = vector.multi_reduction <add>, %48, %cst_18 [1] : vector<8x16xf32> to vector<8xf32>
    %cst_19 = arith.constant 3.906250e-03 : f32
    %50 = vector.broadcast %cst_19 : f32 to vector<8xf32>
    %51 = arith.mulf %49, %50 : vector<8xf32>
    %52 = vector.shape_cast %51 : vector<8xf32> to vector<1x1x8xf32>
    %c0_20 = arith.constant 0 : index
    %c0_21 = arith.constant 0 : index
    %c0_22 = arith.constant 0 : index
    %53 = vector.load %arg5[%c0_20, %c0_21, %c0_22] : memref<1x1x8xf32, #tpu.memory_space<vmem>>, vector<1x1x8xf32>
    tpu.vector_store %arg5[%c0_20, %c0_21, %c0_22], %52 {strides = array<i32>} : memref<1x1x8xf32, #tpu.memory_space<vmem>>, vector<1x1x8xf32>,
    return
  }
  func.func @transform_0(%arg0: i32) -> (i32, i32) {
    %c0_i32 = arith.constant 0 : i32
    %c0_i32_0 = arith.constant 0 : i32
    %c0_i32_1 = arith.constant 0 : i32
    return %c0_i32, %c0_i32_0 : i32, i32
  }
  func.func @transform_1(%arg0: i32) -> (i32, i32) {
    %c0_i32 = arith.constant 0 : i32
    %c0_i32_0 = arith.constant 0 : i32
    %c0_i32_1 = arith.constant 0 : i32
    return %c0_i32, %c0_i32_0 : i32, i32
  }
  func.func @transform_2(%arg0: i32) -> (i32, i32, i32) {
    %c0_i32 = arith.constant 0 : i32
    %c0_i32_0 = arith.constant 0 : i32
    %c0_i32_1 = arith.constant 0 : i32
    return %arg0, %c0_i32, %c0_i32_0 : i32, i32, i32
  }
  func.func @transform_3(%arg0: i32) -> (i32, i32, i32) {
    %c0_i32 = arith.constant 0 : i32
    %c0_i32_0 = arith.constant 0 : i32
    %c0_i32_1 = arith.constant 0 : i32
    return %arg0, %c0_i32, %c0_i32_0 : i32, i32, i32
  }
  func.func @transform_4(%arg0: i32) -> (i32, i32, i32) {
    %c0_i32 = arith.constant 0 : i32
    %c0_i32_0 = arith.constant 0 : i32
    %c0_i32_1 = arith.constant 0 : i32
    return %arg0, %c0_i32, %c0_i32_0 : i32, i32, i32
  }
}

</mosaic_0001>

<llo_original>
// kernel: tpu_custom_call.1
$region0: #{tpu_custom_call.1}
  #allocation0 [shape = 'u32[]', space=smem, size = 0x4, offset = 0x4, fixed_abs, tag = 'smem constant byte address 0x4 - core index']
  #allocation1 [shape = 'u32[72,128]{1,0:T(1,128)}', space=vmem, size = 0x9000, scoped, tag = 'internal scratch']
  %s0 = inlined_call_operand.hbm [shape: f32[16,16], index: 0, kind: input, shape index: {}]
  %s1 = inlined_call_operand.hbm [shape: f32[16,16], index: 1, kind: input, shape index: {}]
  %s2 = inlined_call_operand.hbm [shape: f32[8,16,16], index: 2, kind: input, shape index: {}]
  %s3 = inlined_call_operand.hbm [shape: f32[8,16,16], index: 3, kind: input, shape index: {}]
  %s4 = inlined_call_operand.hbm [shape: f32[1,1,8], index: 4, kind: output, shape index: {}]
  %s5 = sld [smem:[#allocation0]]
  $region42: #{tpu_custom_call.1} parent=0
    _
  %s7 = ssub.s32 1, %s5
  %s8 = scalar_select 0, %s7, %s5
  $region1: #{tpu_custom_call.1} parent=0
    #allocation2 [shape = 'u8[8192]{0}', space=vmem, size = 0x2000, scoped, tag = 'input window, operand 0, single buffered']
    #allocation3 [shape = 's32[1]{0}', space=sflag, size = 0x4, scoped, tag = 'scoped memory for tpu_custom_call.1']
    #allocation4 [shape = 's32[1]{0}', space=sflag, size = 0x4, scoped, tag = 'scoped memory for tpu_custom_call.1']
    #allocation5 [shape = 'u8[8192]{0}', space=vmem, size = 0x2000, scoped, tag = 'input window, operand 1, single buffered']
    #allocation6 [shape = 's32[1]{0}', space=sflag, size = 0x4, scoped, tag = 'scoped memory for tpu_custom_call.1']
    #allocation7 [shape = 'u8[65536]{0}', space=vmem, size = 0x10000, scoped, tag = 'input window, operand 2, single buffered']
    #allocation8 [shape = 'u8[65536]{0}', space=vmem, size = 0x10000, scoped, tag = 'input window, operand 3, single buffered']
    #allocation9 [shape = 's32[1]{0}', space=sflag, size = 0x4, scoped, tag = 'scoped memory for tpu_custom_call.1']
    #allocation10 [shape = 'u8[512]{0}', space=vmem, size = 0x400, scoped, tag = 'output window, operand 0, single buffered']
    %9 = vsyncpa [#allocation3], 0
    %10 = vsyncpa [#allocation6], 0
    %11 = vsyncpa [#allocation9], 0
    %12 = vsyncpa [#allocation4], 0
    // Predicated region
    $region2: #{tpu_custom_call.1} parent=1 // pred_check
      _
    $region3: #{tpu_custom_call.1} parent=1 // pred_check_branch
      %14 = sbr.rel (0) target = $region5
    $region4: #{tpu_custom_call.1} parent=1 // pred_region
      %16 = vsyncadd [#allocation3], 0
      %s17 = sshll.u32 %s0, 4
      %s18 = int_to_ptr.hbm [resolvable:$true] %s17
      %s19 = sshll.u32 [#allocation2], 4
      %s20 = int_to_ptr.vmem [resolvable:$true] %s19
      %25 = dma.hbm_to_vmem [thread:$0]  %s18, 256, %s20, [#allocation3], 128, 128, 8
    $region5: #{tpu_custom_call.1} parent=1 // pred_fallthru
      _
    // Predicated region
    $region6: #{tpu_custom_call.1} parent=1 // pred_check
      _
    $region7: #{tpu_custom_call.1} parent=1 // pred_check_branch
      %27 = sbr.rel (0) target = $region9
    $region8: #{tpu_custom_call.1} parent=1 // pred_region
      %29 = vsyncadd [#allocation6], 0
      %s30 = sshll.u32 %s1, 4
      %s31 = int_to_ptr.hbm [resolvable:$true] %s30
      %s32 = sshll.u32 [#allocation5], 4
      %s33 = int_to_ptr.vmem [resolvable:$true] %s32
      %38 = dma.hbm_to_vmem [thread:$0]  %s31, 256, %s33, [#allocation6], 128, 128, 8
    $region9: #{tpu_custom_call.1} parent=1 // pred_fallthru
      _
    // Predicated region
    $region10: #{tpu_custom_call.1} parent=1 // pred_check
      _
    $region11: #{tpu_custom_call.1} parent=1 // pred_check_branch
      %40 = sbr.rel (0) target = $region13
    $region12: #{tpu_custom_call.1} parent=1 // pred_region
      %42 = vsyncadd [#allocation6], 0
      %s43 = sshll.u32 %s2, 4
      %s44 = int_to_ptr.hbm [resolvable:$true] %s43
      %s45 = sshll.u32 [#allocation7], 4
      %s46 = int_to_ptr.vmem [resolvable:$true] %s45
      %51 = dma.hbm_to_vmem [thread:$0]  %s44, 2048, %s46, [#allocation6], 128, 128, 8
    $region13: #{tpu_custom_call.1} parent=1 // pred_fallthru
      _
    // Predicated region
    $region14: #{tpu_custom_call.1} parent=1 // pred_check
      _
    $region15: #{tpu_custom_call.1} parent=1 // pred_check_branch
      %53 = sbr.rel (0) target = $region17
    $region16: #{tpu_custom_call.1} parent=1 // pred_region
      %55 = vsyncadd [#allocation9], 0
      %s56 = sshll.u32 %s3, 4
      %s57 = int_to_ptr.hbm [resolvable:$true] %s56
      %s58 = sshll.u32 [#allocation8], 4
      %s59 = int_to_ptr.vmem [resolvable:$true] %s58
      %64 = dma.hbm_to_vmem [thread:$0]  %s57, 2048, %s59, [#allocation9], 128, 128, 8
    $region17: #{tpu_custom_call.1} parent=1 // pred_fallthru
      _
    // Predicated region
    $region18: #{tpu_custom_call.1} parent=1 // pred_check
      _
    $region19: #{tpu_custom_call.1} parent=1 // pred_check_branch
      %66 = sbr.rel (0) target = $region21
    $region20: #{tpu_custom_call.1} parent=1 // pred_region
      %68 = dma.done [#allocation3], 256
    $region21: #{tpu_custom_call.1} parent=1 // pred_fallthru
      _
    // Predicated region
    $region22: #{tpu_custom_call.1} parent=1 // pred_check
      _
    $region23: #{tpu_custom_call.1} parent=1 // pred_check_branch
      %70 = sbr.rel (0) target = $region25
    $region24: #{tpu_custom_call.1} parent=1 // pred_region
      %72 = dma.done [#allocation6], 256
    $region25: #{tpu_custom_call.1} parent=1 // pred_fallthru
      _
    // Predicated region
    $region26: #{tpu_custom_call.1} parent=1 // pred_check
      _
    $region27: #{tpu_custom_call.1} parent=1 // pred_check_branch
      %74 = sbr.rel (0) target = $region29
    $region28: #{tpu_custom_call.1} parent=1 // pred_region
      %76 = dma.done [#allocation6], 2048
    $region29: #{tpu_custom_call.1} parent=1 // pred_fallthru
      _
    // Predicated region
    $region30: #{tpu_custom_call.1} parent=1 // pred_check
      _
    $region31: #{tpu_custom_call.1} parent=1 // pred_check_branch
      %78 = sbr.rel (0) target = $region33
    $region32: #{tpu_custom_call.1} parent=1 // pred_region
      %80 = dma.done [#allocation9], 2048
    $region33: #{tpu_custom_call.1} parent=1 // pred_fallthru
      _
    %v81 = vld [vmem:[#allocation2] sm:$0xff]
    %v82 = vld [vmem:[#allocation2 + $0x8] sm:$0xff]
    %v83 = vld [vmem:[#allocation5] sm:$0xff]
    %v84 = vld [vmem:[#allocation5 + $0x8] sm:$0xff]
    %v85 = vld [vmem:[#allocation7] sm:$0xff]
    %v86 = vld [vmem:[#allocation7 + $0x8] sm:$0xff]
    %v87 = vld [vmem:[#allocation7 + $0x10] sm:$0xff]
    %v88 = vld [vmem:[#allocation7 + $0x18] sm:$0xff]
    %v89 = vld [vmem:[#allocation7 + $0x20] sm:$0xff]
    %v90 = vld [vmem:[#allocation7 + $0x28] sm:$0xff]
    %v91 = vld [vmem:[#allocation7 + $0x30] sm:$0xff]
    %v92 = vld [vmem:[#allocation7 + $0x38] sm:$0xff]
    %v93 = vld [vmem:[#allocation7 + $0x40] sm:$0xff]
    %v94 = vld [vmem:[#allocation7 + $0x48] sm:$0xff]
    %v95 = vld [vmem:[#allocation7 + $0x50] sm:$0xff]
    %v96 = vld [vmem:[#allocation7 + $0x58] sm:$0xff]
    %v97 = vld [vmem:[#allocation7 + $0x60] sm:$0xff]
    %v98 = vld [vmem:[#allocation7 + $0x68] sm:$0xff]
    %v99 = vld [vmem:[#allocation7 + $0x70] sm:$0xff]
    %v100 = vld [vmem:[#allocation7 + $0x78] sm:$0xff]
    %v101 = vld [vmem:[#allocation8] sm:$0xff]
    %v102 = vld [vmem:[#allocation8 + $0x8] sm:$0xff]
    %v103 = vld [vmem:[#allocation8 + $0x10] sm:$0xff]
    %v104 = vld [vmem:[#allocation8 + $0x18] sm:$0xff]
    %v105 = vld [vmem:[#allocation8 + $0x20] sm:$0xff]
    %v106 = vld [vmem:[#allocation8 + $0x28] sm:$0xff]
    %v107 = vld [vmem:[#allocation8 + $0x30] sm:$0xff]
    %v108 = vld [vmem:[#allocation8 + $0x38] sm:$0xff]
    %v109 = vld [vmem:[#allocation8 + $0x40] sm:$0xff]
    %v110 = vld [vmem:[#allocation8 + $0x48] sm:$0xff]
    %v111 = vld [vmem:[#allocation8 + $0x50] sm:$0xff]
    %v112 = vld [vmem:[#allocation8 + $0x58] sm:$0xff]
    %v113 = vld [vmem:[#allocation8 + $0x60] sm:$0xff]
    %v114 = vld [vmem:[#allocation8 + $0x68] sm:$0xff]
    %v115 = vld [vmem:[#allocation8 + $0x70] sm:$0xff]
    %v116 = vld [vmem:[#allocation8 + $0x78] sm:$0xff]
    %v117 = vmul.f32 %v85, %v85
    %v118 = vmul.f32 %v86, %v86
    %v119 = vmul.f32 %v87, %v87
    %v120 = vmul.f32 %v88, %v88
    %v121 = vmul.f32 %v89, %v89
    %v122 = vmul.f32 %v90, %v90
    %v123 = vmul.f32 %v91, %v91
    %v124 = vmul.f32 %v92, %v92
    %v125 = vmul.f32 %v93, %v93
    %v126 = vmul.f32 %v94, %v94
    %v127 = vmul.f32 %v95, %v95
    %v128 = vmul.f32 %v96, %v96
    %v129 = vmul.f32 %v97, %v97
    %v130 = vmul.f32 %v98, %v98
    %v131 = vmul.f32 %v99, %v99
    %v132 = vmul.f32 %v100, %v100
    %v133 = vmul.f32 %v101, %v101
    %v134 = vmul.f32 %v102, %v102
    %v135 = vmul.f32 %v103, %v103
    %v136 = vmul.f32 %v104, %v104
    %v137 = vmul.f32 %v105, %v105
    %v138 = vmul.f32 %v106, %v106
    %v139 = vmul.f32 %v107, %v107
    %v140 = vmul.f32 %v108, %v108
    %v141 = vmul.f32 %v109, %v109
    %v142 = vmul.f32 %v110, %v110
    %v143 = vmul.f32 %v111, %v111
    %v144 = vmul.f32 %v112, %v112
    %v145 = vmul.f32 %v113, %v113
    %v146 = vmul.f32 %v114, %v114
    %v147 = vmul.f32 %v115, %v115
    %v148 = vmul.f32 %v116, %v116
    %v149 = vmul.f32 %v85, %v101
    %v150 = vmul.f32 %v86, %v102
    %v151 = vmul.f32 %v87, %v103
    %v152 = vmul.f32 %v88, %v104
    %v153 = vmul.f32 %v89, %v105
    %v154 = vmul.f32 %v90, %v106
    %v155 = vmul.f32 %v91, %v107
    %v156 = vmul.f32 %v92, %v108
    %v157 = vmul.f32 %v93, %v109
    %v158 = vmul.f32 %v94, %v110
    %v159 = vmul.f32 %v95, %v111
    %v160 = vmul.f32 %v96, %v112
    %v161 = vmul.f32 %v97, %v113
    %v162 = vmul.f32 %v98, %v114
    %v163 = vmul.f32 %v99, %v115
    %v164 = vmul.f32 %v100, %v116
    %vm165 = vcmask 130048
    %v167 = vsel %vm165, %v85, 0
    %v170 = vsel %vm165, %v86, 0
    %v173 = vsel %vm165, %v87, 0
    %v176 = vsel %vm165, %v88, 0
    %v179 = vsel %vm165, %v89, 0
    %v182 = vsel %vm165, %v90, 0
    %v185 = vsel %vm165, %v91, 0
    %v188 = vsel %vm165, %v92, 0
    %v191 = vsel %vm165, %v93, 0
    %v194 = vsel %vm165, %v94, 0
    %v197 = vsel %vm165, %v95, 0
    %v200 = vsel %vm165, %v96, 0
    %v203 = vsel %vm165, %v97, 0
    %v206 = vsel %vm165, %v98, 0
    %v209 = vsel %vm165, %v99, 0
    %v212 = vsel %vm165, %v100, 0
    %v215 = vsel %vm165, %v101, 0
    %v218 = vsel %vm165, %v102, 0
    %v221 = vsel %vm165, %v103, 0
    %v224 = vsel %vm165, %v104, 0
    %v227 = vsel %vm165, %v105, 0
    %v230 = vsel %vm165, %v106, 0
    %v233 = vsel %vm165, %v107, 0
    %v236 = vsel %vm165, %v108, 0
    %v239 = vsel %vm165, %v109, 0
    %v242 = vsel %vm165, %v110, 0
    %v245 = vsel %vm165, %v111, 0
    %v248 = vsel %vm165, %v112, 0
    %v251 = vsel %vm165, %v113, 0
    %v254 = vsel %vm165, %v114, 0
    %v257 = vsel %vm165, %v115, 0
    %v260 = vsel %vm165, %v116, 0
    %v263 = vsel %vm165, %v117, 0
    %v266 = vsel %vm165, %v118, 0
    %v269 = vsel %vm165, %v119, 0
    %v272 = vsel %vm165, %v120, 0
    %v275 = vsel %vm165, %v121, 0
    %v278 = vsel %vm165, %v122, 0
    %v281 = vsel %vm165, %v123, 0
    %v284 = vsel %vm165, %v124, 0
    %v287 = vsel %vm165, %v125, 0
    %v290 = vsel %vm165, %v126, 0
    %v293 = vsel %vm165, %v127, 0
    %v296 = vsel %vm165, %v128, 0
    %v299 = vsel %vm165, %v129, 0
    %v302 = vsel %vm165, %v130, 0
    %v305 = vsel %vm165, %v131, 0
    %v308 = vsel %vm165, %v132, 0
    %v311 = vsel %vm165, %v133, 0
    %v314 = vsel %vm165, %v134, 0
    %v317 = vsel %vm165, %v135, 0
    %v320 = vsel %vm165, %v136, 0
    %v323 = vsel %vm165, %v137, 0
    %v326 = vsel %vm165, %v138, 0
    %v329 = vsel %vm165, %v139, 0
    %v332 = vsel %vm165, %v140, 0
    %v335 = vsel %vm165, %v141, 0
    %v338 = vsel %vm165, %v142, 0
    %v341 = vsel %vm165, %v143, 0
    %v344 = vsel %vm165, %v144, 0
    %v347 = vsel %vm165, %v145, 0
    %v350 = vsel %vm165, %v146, 0
    %v353 = vsel %vm165, %v147, 0
    %v356 = vsel %vm165, %v148, 0
    %v359 = vsel %vm165, %v149, 0
    %v362 = vsel %vm165, %v150, 0
    %v365 = vsel %vm165, %v151, 0
    %v368 = vsel %vm165, %v152, 0
    %v371 = vsel %vm165, %v153, 0
    %v374 = vsel %vm165, %v154, 0
    %v377 = vsel %vm165, %v155, 0
    %v380 = vsel %vm165, %v156, 0
    %v383 = vsel %vm165, %v157, 0
    %v386 = vsel %vm165, %v158, 0
    %v389 = vsel %vm165, %v159, 0
    %v392 = vsel %vm165, %v160, 0
    %v395 = vsel %vm165, %v161, 0
    %v398 = vsel %vm165, %v162, 0
    %v401 = vsel %vm165, %v163, 0
    %v404 = vsel %vm165, %v164, 0
    %406 = vmatpush.msra.mxu0 0.0
    %407 = vmatpush.msra.mxu0 0.0
    %408 = vmatpush.msra.mxu0 0.0
    %409 = vmatpush.msra.mxu0 0.0
    %410 = vmatpush.msra.mxu0 0.0
    %411 = vmatpush.msra.mxu0 0.0
    %412 = vmatpush.msra.mxu0 0.0
    %413 = vmatpush.msra.mxu0 0.0
    %414 = vmatpush.msra.mxu0 0.0
    %415 = vmatpush.msra.mxu0 0.0
    %416 = vmatpush.msra.mxu0 0.0
    %417 = vmatpush.msra.mxu0 0.0
    %418 = vmatpush.msra.mxu0 0.0
    %419 = vmatpush.msra.mxu0 0.0
    %420 = vmatpush.msra.mxu0 %v82
    %421 = vmatpush.msra.mxu0 %v81
    %422 = vmatmul.f32.gmra.mxu0 %v167
    %v423 = vpop.f32.mrf.mxu0
    %v424 = vadd.f32 0.0, %v423
    %425 = vmatmul.f32.gmra.mxu0 %v170
    %v426 = vpop.f32.mrf.mxu0
    %v427 = vadd.f32 0.0, %v426
    %428 = vmatmul.f32.gmra.mxu0 %v173
    %v429 = vpop.f32.mrf.mxu0
    %v430 = vadd.f32 0.0, %v429
    %431 = vmatmul.f32.gmra.mxu0 %v176
    %v432 = vpop.f32.mrf.mxu0
    %v433 = vadd.f32 0.0, %v432
    %434 = vmatmul.f32.gmra.mxu0 %v179
    %v435 = vpop.f32.mrf.mxu0
    %v436 = vadd.f32 0.0, %v435
    %437 = vmatmul.f32.gmra.mxu0 %v182
    %v438 = vpop.f32.mrf.mxu0
    %v439 = vadd.f32 0.0, %v438
    %440 = vmatmul.f32.gmra.mxu0 %v185
    %v441 = vpop.f32.mrf.mxu0
    %v442 = vadd.f32 0.0, %v441
    %443 = vmatmul.f32.gmra.mxu0 %v188
    %v444 = vpop.f32.mrf.mxu0
    %v445 = vadd.f32 0.0, %v444
    %446 = vmatmul.f32.gmra.mxu0 %v191
    %v447 = vpop.f32.mrf.mxu0
    %v448 = vadd.f32 0.0, %v447
    %449 = vmatmul.f32.gmra.mxu0 %v194
    %v450 = vpop.f32.mrf.mxu0
    %v451 = vadd.f32 0.0, %v450
    %452 = vmatmul.f32.gmra.mxu0 %v197
    %v453 = vpop.f32.mrf.mxu0
    %v454 = vadd.f32 0.0, %v453
    %455 = vmatmul.f32.gmra.mxu0 %v200
    %v456 = vpop.f32.mrf.mxu0
    %v457 = vadd.f32 0.0, %v456
    %458 = vmatmul.f32.gmra.mxu0 %v203
    %v459 = vpop.f32.mrf.mxu0
    %v460 = vadd.f32 0.0, %v459
    %461 = vmatmul.f32.gmra.mxu0 %v206
    %v462 = vpop.f32.mrf.mxu0
    %v463 = vadd.f32 0.0, %v462
    %464 = vmatmul.f32.gmra.mxu0 %v209
    %v465 = vpop.f32.mrf.mxu0
    %v466 = vadd.f32 0.0, %v465
    %467 = vmatmul.f32.gmra.mxu0 %v212
    %v468 = vpop.f32.mrf.mxu0
    %v469 = vadd.f32 0.0, %v468
    %470 = vmatmul.f32.gmra.mxu0 %v215
    %v471 = vpop.f32.mrf.mxu0
    %v472 = vadd.f32 0.0, %v471
    %473 = vmatmul.f32.gmra.mxu0 %v218
    %v474 = vpop.f32.mrf.mxu0
    %v475 = vadd.f32 0.0, %v474
    %476 = vmatmul.f32.gmra.mxu0 %v221
    %v477 = vpop.f32.mrf.mxu0
    %v478 = vadd.f32 0.0, %v477
    %479 = vmatmul.f32.gmra.mxu0 %v224
    %v480 = vpop.f32.mrf.mxu0
    %v481 = vadd.f32 0.0, %v480
    %482 = vmatmul.f32.gmra.mxu0 %v227
    %v483 = vpop.f32.mrf.mxu0
    %v484 = vadd.f32 0.0, %v483
    %485 = vmatmul.f32.gmra.mxu0 %v230
    %v486 = vpop.f32.mrf.mxu0
    %v487 = vadd.f32 0.0, %v486
    %488 = vmatmul.f32.gmra.mxu0 %v233
    %v489 = vpop.f32.mrf.mxu0
    %v490 = vadd.f32 0.0, %v489
    %491 = vmatmul.f32.gmra.mxu0 %v236
    %v492 = vpop.f32.mrf.mxu0
    %v493 = vadd.f32 0.0, %v492
    %494 = vmatmul.f32.gmra.mxu0 %v239
    %v495 = vpop.f32.mrf.mxu0
    %v496 = vadd.f32 0.0, %v495
    %497 = vmatmul.f32.gmra.mxu0 %v242
    %v498 = vpop.f32.mrf.mxu0
    %v499 = vadd.f32 0.0, %v498
    %500 = vmatmul.f32.gmra.mxu0 %v245
    %v501 = vpop.f32.mrf.mxu0
    %v502 = vadd.f32 0.0, %v501
    %503 = vmatmul.f32.gmra.mxu0 %v248
    %v504 = vpop.f32.mrf.mxu0
    %v505 = vadd.f32 0.0, %v504
    %506 = vmatmul.f32.gmra.mxu0 %v251
    %v507 = vpop.f32.mrf.mxu0
    %v508 = vadd.f32 0.0, %v507
    %509 = vmatmul.f32.gmra.mxu0 %v254
    %v510 = vpop.f32.mrf.mxu0
    %v511 = vadd.f32 0.0, %v510
    %512 = vmatmul.f32.gmra.mxu0 %v257
    %v513 = vpop.f32.mrf.mxu0
    %v514 = vadd.f32 0.0, %v513
    %515 = vmatmul.f32.gmra.mxu0 %v260
    %v516 = vpop.f32.mrf.mxu0
    %v517 = vadd.f32 0.0, %v516
    %518 = vmatmul.f32.gmra.mxu0 %v263
    %v519 = vpop.f32.mrf.mxu0
    %v520 = vadd.f32 0.0, %v519
    %521 = vmatmul.f32.gmra.mxu0 %v266
    %v522 = vpop.f32.mrf.mxu0
    %v523 = vadd.f32 0.0, %v522
    %524 = vmatmul.f32.gmra.mxu0 %v269
    %v525 = vpop.f32.mrf.mxu0
    %v526 = vadd.f32 0.0, %v525
    %527 = vmatmul.f32.gmra.mxu0 %v272
    %v528 = vpop.f32.mrf.mxu0
    %v529 = vadd.f32 0.0, %v528
    %530 = vmatmul.f32.gmra.mxu0 %v275
    %v531 = vpop.f32.mrf.mxu0
    %v532 = vadd.f32 0.0, %v531
    %533 = vmatmul.f32.gmra.mxu0 %v278
    %v534 = vpop.f32.mrf.mxu0
    %v535 = vadd.f32 0.0, %v534
    %536 = vmatmul.f32.gmra.mxu0 %v281
    %v537 = vpop.f32.mrf.mxu0
    %v538 = vadd.f32 0.0, %v537
    %539 = vmatmul.f32.gmra.mxu0 %v284
    %v540 = vpop.f32.mrf.mxu0
    %v541 = vadd.f32 0.0, %v540
    %542 = vmatmul.f32.gmra.mxu0 %v287
    %v543 = vpop.f32.mrf.mxu0
    %v544 = vadd.f32 0.0, %v543
    %545 = vmatmul.f32.gmra.mxu0 %v290
    %v546 = vpop.f32.mrf.mxu0
    %v547 = vadd.f32 0.0, %v546
    %548 = vmatmul.f32.gmra.mxu0 %v293
    %v549 = vpop.f32.mrf.mxu0
    %v550 = vadd.f32 0.0, %v549
    %551 = vmatmul.f32.gmra.mxu0 %v296
    %v552 = vpop.f32.mrf.mxu0
    %v553 = vadd.f32 0.0, %v552
    %554 = vmatmul.f32.gmra.mxu0 %v299
    %v555 = vpop.f32.mrf.mxu0
    %v556 = vadd.f32 0.0, %v555
    %557 = vmatmul.f32.gmra.mxu0 %v302
    %v558 = vpop.f32.mrf.mxu0
    %v559 = vadd.f32 0.0, %v558
    %560 = vmatmul.f32.gmra.mxu0 %v305
    %v561 = vpop.f32.mrf.mxu0
    %v562 = vadd.f32 0.0, %v561
    %563 = vmatmul.f32.gmra.mxu0 %v308
    %v564 = vpop.f32.mrf.mxu0
    %v565 = vadd.f32 0.0, %v564
    %566 = vmatmul.f32.gmra.mxu0 %v311
    %v567 = vpop.f32.mrf.mxu0
    %v568 = vadd.f32 0.0, %v567
    %569 = vmatmul.f32.gmra.mxu0 %v314
    %v570 = vpop.f32.mrf.mxu0
    %v571 = vadd.f32 0.0, %v570
    %572 = vmatmul.f32.gmra.mxu0 %v317
    %v573 = vpop.f32.mrf.mxu0
    %v574 = vadd.f32 0.0, %v573
    %575 = vmatmul.f32.gmra.mxu0 %v320
    %v576 = vpop.f32.mrf.mxu0
    %v577 = vadd.f32 0.0, %v576
    %578 = vmatmul.f32.gmra.mxu0 %v323
    %v579 = vpop.f32.mrf.mxu0
    %v580 = vadd.f32 0.0, %v579
    %581 = vmatmul.f32.gmra.mxu0 %v326
    %v582 = vpop.f32.mrf.mxu0
    %v583 = vadd.f32 0.0, %v582
    %584 = vmatmul.f32.gmra.mxu0 %v329
    %v585 = vpop.f32.mrf.mxu0
    %v586 = vadd.f32 0.0, %v585
    %587 = vmatmul.f32.gmra.mxu0 %v332
    %v588 = vpop.f32.mrf.mxu0
    %v589 = vadd.f32 0.0, %v588
    %590 = vmatmul.f32.gmra.mxu0 %v335
    %v591 = vpop.f32.mrf.mxu0
    %v592 = vadd.f32 0.0, %v591
    %593 = vmatmul.f32.gmra.mxu0 %v338
    %v594 = vpop.f32.mrf.mxu0
    %v595 = vadd.f32 0.0, %v594
    %596 = vmatmul.f32.gmra.mxu0 %v341
    %v597 = vpop.f32.mrf.mxu0
    %v598 = vadd.f32 0.0, %v597
    %599 = vmatmul.f32.gmra.mxu0 %v344
    %v600 = vpop.f32.mrf.mxu0
    %v601 = vadd.f32 0.0, %v600
    %602 = vmatmul.f32.gmra.mxu0 %v347
    %v603 = vpop.f32.mrf.mxu0
    %v604 = vadd.f32 0.0, %v603
    %605 = vmatmul.f32.gmra.mxu0 %v350
    %v606 = vpop.f32.mrf.mxu0
    %v607 = vadd.f32 0.0, %v606
    %608 = vmatmul.f32.gmra.mxu0 %v353
    %v609 = vpop.f32.mrf.mxu0
    %v610 = vadd.f32 0.0, %v609
    %611 = vmatmul.f32.gmra.mxu0 %v356
    %v612 = vpop.f32.mrf.mxu0
    %v613 = vadd.f32 0.0, %v612
    %614 = vmatmul.f32.gmra.mxu0 %v359
    %v615 = vpop.f32.mrf.mxu0
    %v616 = vadd.f32 0.0, %v615
    %617 = vmatmul.f32.gmra.mxu0 %v362
    %v618 = vpop.f32.mrf.mxu0
    %v619 = vadd.f32 0.0, %v618
    %620 = vmatmul.f32.gmra.mxu0 %v365
    %v621 = vpop.f32.mrf.mxu0
    %v622 = vadd.f32 0.0, %v621
    %623 = vmatmul.f32.gmra.mxu0 %v368
    %v624 = vpop.f32.mrf.mxu0
    %v625 = vadd.f32 0.0, %v624
    %626 = vmatmul.f32.gmra.mxu0 %v371
    %v627 = vpop.f32.mrf.mxu0
    %v628 = vadd.f32 0.0, %v627
    %629 = vmatmul.f32.gmra.mxu0 %v374
    %v630 = vpop.f32.mrf.mxu0
    %v631 = vadd.f32 0.0, %v630
    %632 = vmatmul.f32.gmra.mxu0 %v377
    %v633 = vpop.f32.mrf.mxu0
    %v634 = vadd.f32 0.0, %v633
    %635 = vmatmul.f32.gmra.mxu0 %v380
    %v636 = vpop.f32.mrf.mxu0
    %v637 = vadd.f32 0.0, %v636
    %638 = vmatmul.f32.gmra.mxu0 %v383
    %v639 = vpop.f32.mrf.mxu0
    %v640 = vadd.f32 0.0, %v639
    %641 = vmatmul.f32.gmra.mxu0 %v386
    %v642 = vpop.f32.mrf.mxu0
    %v643 = vadd.f32 0.0, %v642
    %644 = vmatmul.f32.gmra.mxu0 %v389
    %v645 = vpop.f32.mrf.mxu0
    %v646 = vadd.f32 0.0, %v645
    %647 = vmatmul.f32.gmra.mxu0 %v392
    %v648 = vpop.f32.mrf.mxu0
    %v649 = vadd.f32 0.0, %v648
    %650 = vmatmul.f32.gmra.mxu0 %v395
    %v651 = vpop.f32.mrf.mxu0
    %v652 = vadd.f32 0.0, %v651
    %653 = vmatmul.f32.gmra.mxu0 %v398
    %v654 = vpop.f32.mrf.mxu0
    %v655 = vadd.f32 0.0, %v654
    %656 = vmatmul.f32.gmra.mxu0 %v401
    %v657 = vpop.f32.mrf.mxu0
    %v658 = vadd.f32 0.0, %v657
    %659 = vmatmul.f32.gmra.mxu0 %v404
    %v660 = vpop.f32.mrf.mxu0
    %v661 = vadd.f32 0.0, %v660
    %662 = vdwg.mxu0
    %663 = vxpose.xlu0.b32.start [1/16] %v424, 128
    %664 = vxpose.xlu0.b32.cont [2/16] %v427, 128
    %665 = vxpose.xlu0.b32.cont [3/16] 0.0, 128
    %666 = vxpose.xlu0.b32.cont [4/16] 0.0, 128
    %667 = vxpose.xlu0.b32.cont [5/16] 0.0, 128
    %668 = vxpose.xlu0.b32.cont [6/16] 0.0, 128
    %669 = vxpose.xlu0.b32.cont [7/16] 0.0, 128
    %670 = vxpose.xlu0.b32.cont [8/16] 0.0, 128
    %671 = vxpose.xlu0.b32.cont [9/16] 0.0, 128
    %672 = vxpose.xlu0.b32.cont [10/16] 0.0, 128
    %673 = vxpose.xlu0.b32.cont [11/16] 0.0, 128
    %674 = vxpose.xlu0.b32.cont [12/16] 0.0, 128
    %675 = vxpose.xlu0.b32.cont [13/16] 0.0, 128
    %676 = vxpose.xlu0.b32.cont [14/16] 0.0, 128
    %677 = vxpose.xlu0.b32.cont [15/16] 0.0, 128
    %678 = vxpose.xlu0.b32.end [16/16] 0.0, 128
    %v679 = vpop.trf.xlu0
    %v680 = vpop.trf.xlu0
    %v681 = vpop.trf.xlu0
    %v682 = vpop.trf.xlu0
    %v683 = vpop.trf.xlu0
    %v684 = vpop.trf.xlu0
    %v685 = vpop.trf.xlu0
    %v686 = vpop.trf.xlu0
    %v687 = vpop.trf.xlu0
    %v688 = vpop.trf.xlu0
    %v689 = vpop.trf.xlu0
    %v690 = vpop.trf.xlu0
    %v691 = vpop.trf.xlu0
    %v692 = vpop.trf.xlu0
    %v693 = vpop.trf.xlu0
    %v694 = vpop.trf.xlu0
    %695 = vxpose.xlu0.b32.start [1/16] %v430, 128
    %696 = vxpose.xlu0.b32.cont [2/16] %v433, 128
    %697 = vxpose.xlu0.b32.cont [3/16] 0.0, 128
    %698 = vxpose.xlu0.b32.cont [4/16] 0.0, 128
    %699 = vxpose.xlu0.b32.cont [5/16] 0.0, 128
    %700 = vxpose.xlu0.b32.cont [6/16] 0.0, 128
    %701 = vxpose.xlu0.b32.cont [7/16] 0.0, 128
    %702 = vxpose.xlu0.b32.cont [8/16] 0.0, 128
    %703 = vxpose.xlu0.b32.cont [9/16] 0.0, 128
    %704 = vxpose.xlu0.b32.cont [10/16] 0.0, 128
    %705 = vxpose.xlu0.b32.cont [11/16] 0.0, 128
    %706 = vxpose.xlu0.b32.cont [12/16] 0.0, 128
    %707 = vxpose.xlu0.b32.cont [13/16] 0.0, 128
    %708 = vxpose.xlu0.b32.cont [14/16] 0.0, 128
    %709 = vxpose.xlu0.b32.cont [15/16] 0.0, 128
    %710 = vxpose.xlu0.b32.end [16/16] 0.0, 128
    %v711 = vpop.trf.xlu0
    %v712 = vpop.trf.xlu0
    %v713 = vpop.trf.xlu0
    %v714 = vpop.trf.xlu0
    %v715 = vpop.trf.xlu0
    %v716 = vpop.trf.xlu0
    %v717 = vpop.trf.xlu0
    %v718 = vpop.trf.xlu0
    %v719 = vpop.trf.xlu0
    %v720 = vpop.trf.xlu0
    %v721 = vpop.trf.xlu0
    %v722 = vpop.trf.xlu0
    %v723 = vpop.trf.xlu0
    %v724 = vpop.trf.xlu0
    %v725 = vpop.trf.xlu0
    %v726 = vpop.trf.xlu0
    %727 = vxpose.xlu0.b32.start [1/16] %v436, 128
    %728 = vxpose.xlu0.b32.cont [2/16] %v439, 128
    %729 = vxpose.xlu0.b32.cont [3/16] 0.0, 128
    %730 = vxpose.xlu0.b32.cont [4/16] 0.0, 128
    %731 = vxpose.xlu0.b32.cont [5/16] 0.0, 128
    %732 = vxpose.xlu0.b32.cont [6/16] 0.0, 128
    %733 = vxpose.xlu0.b32.cont [7/16] 0.0, 128
    %734 = vxpose.xlu0.b32.cont [8/16] 0.0, 128
    %735 = vxpose.xlu0.b32.cont [9/16] 0.0, 128
    %736 = vxpose.xlu0.b32.cont [10/16] 0.0, 128
    %737 = vxpose.xlu0.b32.cont [11/16] 0.0, 128
    %738 = vxpose.xlu0.b32.cont [12/16] 0.0, 128
    %739 = vxpose.xlu0.b32.cont [13/16] 0.0, 128
    %740 = vxpose.xlu0.b32.cont [14/16] 0.0, 128
    %741 = vxpose.xlu0.b32.cont [15/16] 0.0, 128
    %742 = vxpose.xlu0.b32.end [16/16] 0.0, 128
    %v743 = vpop.trf.xlu0
    %v744 = vpop.trf.xlu0
    %v745 = vpop.trf.xlu0
    %v746 = vpop.trf.xlu0
    %v747 = vpop.trf.xlu0
    %v748 = vpop.trf.xlu0
    %v749 = vpop.trf.xlu0
    %v750 = vpop.trf.xlu0
    %v751 = vpop.trf.xlu0
    %v752 = vpop.trf.xlu0
    %v753 = vpop.trf.xlu0
    %v754 = vpop.trf.xlu0
    %v755 = vpop.trf.xlu0
    %v756 = vpop.trf.xlu0
    %v757 = vpop.trf.xlu0
    %v758 = vpop.trf.xlu0
    %759 = vxpose.xlu0.b32.start [1/16] %v442, 128
    %760 = vxpose.xlu0.b32.cont [2/16] %v445, 128
    %761 = vxpose.xlu0.b32.cont [3/16] 0.0, 128
    %762 = vxpose.xlu0.b32.cont [4/16] 0.0, 128
    %763 = vxpose.xlu0.b32.cont [5/16] 0.0, 128
    %764 = vxpose.xlu0.b32.cont [6/16] 0.0, 128
    %765 = vxpose.xlu0.b32.cont [7/16] 0.0, 128
    %766 = vxpose.xlu0.b32.cont [8/16] 0.0, 128
    %767 = vxpose.xlu0.b32.cont [9/16] 0.0, 128
    %768 = vxpose.xlu0.b32.cont [10/16] 0.0, 128
    %769 = vxpose.xlu0.b32.cont [11/16] 0.0, 128
    %770 = vxpose.xlu0.b32.cont [12/16] 0.0, 128
    %771 = vxpose.xlu0.b32.cont [13/16] 0.0, 128
    %772 = vxpose.xlu0.b32.cont [14/16] 0.0, 128
    %773 = vxpose.xlu0.b32.cont [15/16] 0.0, 128
    %774 = vxpose.xlu0.b32.end [16/16] 0.0, 128
    %v775 = vpop.trf.xlu0
    %v776 = vpop.trf.xlu0
    %v777 = vpop.trf.xlu0
    %v778 = vpop.trf.xlu0
    %v779 = vpop.trf.xlu0
    %v780 = vpop.trf.xlu0
    %v781 = vpop.trf.xlu0
    %v782 = vpop.trf.xlu0
    %v783 = vpop.trf.xlu0
    %v784 = vpop.trf.xlu0
    %v785 = vpop.trf.xlu0
    %v786 = vpop.trf.xlu0
    %v787 = vpop.trf.xlu0
    %v788 = vpop.trf.xlu0
    %v789 = vpop.trf.xlu0
    %v790 = vpop.trf.xlu0
    %791 = vxpose.xlu0.b32.start [1/16] %v448, 128
    %792 = vxpose.xlu0.b32.cont [2/16] %v451, 128
    %793 = vxpose.xlu0.b32.cont [3/16] 0.0, 128
    %794 = vxpose.xlu0.b32.cont [4/16] 0.0, 128
    %795 = vxpose.xlu0.b32.cont [5/16] 0.0, 128
    %796 = vxpose.xlu0.b32.cont [6/16] 0.0, 128
    %797 = vxpose.xlu0.b32.cont [7/16] 0.0, 128
    %798 = vxpose.xlu0.b32.cont [8/16] 0.0, 128
    %799 = vxpose.xlu0.b32.cont [9/16] 0.0, 128
    %800 = vxpose.xlu0.b32.cont [10/16] 0.0, 128
    %801 = vxpose.xlu0.b32.cont [11/16] 0.0, 128
    %802 = vxpose.xlu0.b32.cont [12/16] 0.0, 128
    %803 = vxpose.xlu0.b32.cont [13/16] 0.0, 128
    %804 = vxpose.xlu0.b32.cont [14/16] 0.0, 128
    %805 = vxpose.xlu0.b32.cont [15/16] 0.0, 128
    %806 = vxpose.xlu0.b32.end [16/16] 0.0, 128
    %v807 = vpop.trf.xlu0
    %v808 = vpop.trf.xlu0
    %v809 = vpop.trf.xlu0
    %v810 = vpop.trf.xlu0
    %v811 = vpop.trf.xlu0
    %v812 = vpop.trf.xlu0
    %v813 = vpop.trf.xlu0
    %v814 = vpop.trf.xlu0
    %v815 = vpop.trf.xlu0
    %v816 = vpop.trf.xlu0
    %v817 = vpop.trf.xlu0
    %v818 = vpop.trf.xlu0
    %v819 = vpop.trf.xlu0
    %v820 = vpop.trf.xlu0
    %v821 = vpop.trf.xlu0
    %v822 = vpop.trf.xlu0
    %823 = vxpose.xlu0.b32.start [1/16] %v454, 128
    %824 = vxpose.xlu0.b32.cont [2/16] %v457, 128
    %825 = vxpose.xlu0.b32.cont [3/16] 0.0, 128
    %826 = vxpose.xlu0.b32.cont [4/16] 0.0, 128
    %827 = vxpose.xlu0.b32.cont [5/16] 0.0, 128
    %828 = vxpose.xlu0.b32.cont [6/16] 0.0, 128
    %829 = vxpose.xlu0.b32.cont [7/16] 0.0, 128
    %830 = vxpose.xlu0.b32.cont [8/16] 0.0, 128
    %831 = vxpose.xlu0.b32.cont [9/16] 0.0, 128
    %832 = vxpose.xlu0.b32.cont [10/16] 0.0, 128
    %833 = vxpose.xlu0.b32.cont [11/16] 0.0, 128
    %834 = vxpose.xlu0.b32.cont [12/16] 0.0, 128
    %835 = vxpose.xlu0.b32.cont [13/16] 0.0, 128
    %836 = vxpose.xlu0.b32.cont [14/16] 0.0, 128
    %837 = vxpose.xlu0.b32.cont [15/16] 0.0, 128
    %838 = vxpose.xlu0.b32.end [16/16] 0.0, 128
    %v839 = vpop.trf.xlu0
    %v840 = vpop.trf.xlu0
    %v841 = vpop.trf.xlu0
    %v842 = vpop.trf.xlu0
    %v843 = vpop.trf.xlu0
    %v844 = vpop.trf.xlu0
    %v845 = vpop.trf.xlu0
    %v846 = vpop.trf.xlu0
    %v847 = vpop.trf.xlu0
    %v848 = vpop.trf.xlu0
    %v849 = vpop.trf.xlu0
    %v850 = vpop.trf.xlu0
    %v851 = vpop.trf.xlu0
    %v852 = vpop.trf.xlu0
    %v853 = vpop.trf.xlu0
    %v854 = vpop.trf.xlu0
    %855 = vxpose.xlu0.b32.start [1/16] %v460, 128
    %856 = vxpose.xlu0.b32.cont [2/16] %v463, 128
    %857 = vxpose.xlu0.b32.cont [3/16] 0.0, 128
    %858 = vxpose.xlu0.b32.cont [4/16] 0.0, 128
    %859 = vxpose.xlu0.b32.cont [5/16] 0.0, 128
    %860 = vxpose.xlu0.b32.cont [6/16] 0.0, 128
    %861 = vxpose.xlu0.b32.cont [7/16] 0.0, 128
    %862 = vxpose.xlu0.b32.cont [8/16] 0.0, 128
    %863 = vxpose.xlu0.b32.cont [9/16] 0.0, 128
    %864 = vxpose.xlu0.b32.cont [10/16] 0.0, 128
    %865 = vxpose.xlu0.b32.cont [11/16] 0.0, 128
    %866 = vxpose.xlu0.b32.cont [12/16] 0.0, 128
    %867 = vxpose.xlu0.b32.cont [13/16] 0.0, 128
    %868 = vxpose.xlu0.b32.cont [14/16] 0.0, 128
    %869 = vxpose.xlu0.b32.cont [15/16] 0.0, 128
    %870 = vxpose.xlu0.b32.end [16/16] 0.0, 128
    %v871 = vpop.trf.xlu0
    %v872 = vpop.trf.xlu0
    %v873 = vpop.trf.xlu0
    %v874 = vpop.trf.xlu0
    %v875 = vpop.trf.xlu0
    %v876 = vpop.trf.xlu0
    %v877 = vpop.trf.xlu0
    %v878 = vpop.trf.xlu0
    %v879 = vpop.trf.xlu0
    %v880 = vpop.trf.xlu0
    %v881 = vpop.trf.xlu0
    %v882 = vpop.trf.xlu0
    %v883 = vpop.trf.xlu0
    %v884 = vpop.trf.xlu0
    %v885 = vpop.trf.xlu0
    %v886 = vpop.trf.xlu0
    %887 = vxpose.xlu0.b32.start [1/16] %v466, 128
    %888 = vxpose.xlu0.b32.cont [2/16] %v469, 128
    %889 = vxpose.xlu0.b32.cont [3/16] 0.0, 128
    %890 = vxpose.xlu0.b32.cont [4/16] 0.0, 128
    %891 = vxpose.xlu0.b32.cont [5/16] 0.0, 128
    %892 = vxpose.xlu0.b32.cont [6/16] 0.0, 128
    %893 = vxpose.xlu0.b32.cont [7/16] 0.0, 128
    %894 = vxpose.xlu0.b32.cont [8/16] 0.0, 128
    %895 = vxpose.xlu0.b32.cont [9/16] 0.0, 128
    %896 = vxpose.xlu0.b32.cont [10/16] 0.0, 128
    %897 = vxpose.xlu0.b32.cont [11/16] 0.0, 128
    %898 = vxpose.xlu0.b32.cont [12/16] 0.0, 128
    %899 = vxpose.xlu0.b32.cont [13/16] 0.0, 128
    %900 = vxpose.xlu0.b32.cont [14/16] 0.0, 128
    %901 = vxpose.xlu0.b32.cont [15/16] 0.0, 128
    %902 = vxpose.xlu0.b32.end [16/16] 0.0, 128
    %v903 = vpop.trf.xlu0
    %v904 = vpop.trf.xlu0
    %v905 = vpop.trf.xlu0
    %v906 = vpop.trf.xlu0
    %v907 = vpop.trf.xlu0
    %v908 = vpop.trf.xlu0
    %v909 = vpop.trf.xlu0
    %v910 = vpop.trf.xlu0
    %v911 = vpop.trf.xlu0
    %v912 = vpop.trf.xlu0
    %v913 = vpop.trf.xlu0
    %v914 = vpop.trf.xlu0
    %v915 = vpop.trf.xlu0
    %v916 = vpop.trf.xlu0
    %v917 = vpop.trf.xlu0
    %v918 = vpop.trf.xlu0
    %919 = vxpose.xlu0.b32.start [1/16] %v472, 128
    %920 = vxpose.xlu0.b32.cont [2/16] %v475, 128
    %921 = vxpose.xlu0.b32.cont [3/16] 0.0, 128
    %922 = vxpose.xlu0.b32.cont [4/16] 0.0, 128
    %923 = vxpose.xlu0.b32.cont [5/16] 0.0, 128
    %924 = vxpose.xlu0.b32.cont [6/16] 0.0, 128
    %925 = vxpose.xlu0.b32.cont [7/16] 0.0, 128
    %926 = vxpose.xlu0.b32.cont [8/16] 0.0, 128
    %927 = vxpose.xlu0.b32.cont [9/16] 0.0, 128
    %928 = vxpose.xlu0.b32.cont [10/16] 0.0, 128
    %929 = vxpose.xlu0.b32.cont [11/16] 0.0, 128
    %930 = vxpose.xlu0.b32.cont [12/16] 0.0, 128
    %931 = vxpose.xlu0.b32.cont [13/16] 0.0, 128
    %932 = vxpose.xlu0.b32.cont [14/16] 0.0, 128
    %933 = vxpose.xlu0.b32.cont [15/16] 0.0, 128
    %934 = vxpose.xlu0.b32.end [16/16] 0.0, 128
    %v935 = vpop.trf.xlu0
    %v936 = vpop.trf.xlu0
    %v937 = vpop.trf.xlu0
    %v938 = vpop.trf.xlu0
    %v939 = vpop.trf.xlu0
    %v940 = vpop.trf.xlu0
    %v941 = vpop.trf.xlu0
    %v942 = vpop.trf.xlu0
    %v943 = vpop.trf.xlu0
    %v944 = vpop.trf.xlu0
    %v945 = vpop.trf.xlu0
    %v946 = vpop.trf.xlu0
    %v947 = vpop.trf.xlu0
    %v948 = vpop.trf.xlu0
    %v949 = vpop.trf.xlu0
    %v950 = vpop.trf.xlu0
    %951 = vxpose.xlu0.b32.start [1/16] %v478, 128
    %952 = vxpose.xlu0.b32.cont [2/16] %v481, 128
    %953 = vxpose.xlu0.b32.cont [3/16] 0.0, 128
    %954 = vxpose.xlu0.b32.cont [4/16] 0.0, 128
    %955 = vxpose.xlu0.b32.cont [5/16] 0.0, 128
    %956 = vxpose.xlu0.b32.cont [6/16] 0.0, 128
    %957 = vxpose.xlu0.b32.cont [7/16] 0.0, 128
    %958 = vxpose.xlu0.b32.cont [8/16] 0.0, 128
    %959 = vxpose.xlu0.b32.cont [9/16] 0.0, 128
    %960 = vxpose.xlu0.b32.cont [10/16] 0.0, 128
    %961 = vxpose.xlu0.b32.cont [11/16] 0.0, 128
    %962 = vxpose.xlu0.b32.cont [12/16] 0.0, 128
    %963 = vxpose.xlu0.b32.cont [13/16] 0.0, 128
    %964 = vxpose.xlu0.b32.cont [14/16] 0.0, 128
    %965 = vxpose.xlu0.b32.cont [15/16] 0.0, 128
    %966 = vxpose.xlu0.b32.end [16/16] 0.0, 128
    %v967 = vpop.trf.xlu0
    %v968 = vpop.trf.xlu0
    %v969 = vpop.trf.xlu0
    %v970 = vpop.trf.xlu0
    %v971 = vpop.trf.xlu0
    %v972 = vpop.trf.xlu0
    %v973 = vpop.trf.xlu0
    %v974 = vpop.trf.xlu0
    %v975 = vpop.trf.xlu0
    %v976 = vpop.trf.xlu0
    %v977 = vpop.trf.xlu0
    %v978 = vpop.trf.xlu0
    %v979 = vpop.trf.xlu0
    %v980 = vpop.trf.xlu0
    %v981 = vpop.trf.xlu0
    %v982 = vpop.trf.xlu0
    %983 = vxpose.xlu0.b32.start [1/16] %v484, 128
    %984 = vxpose.xlu0.b32.cont [2/16] %v487, 128
    %985 = vxpose.xlu0.b32.cont [3/16] 0.0, 128
    %986 = vxpose.xlu0.b32.cont [4/16] 0.0, 128
    %987 = vxpose.xlu0.b32.cont [5/16] 0.0, 128
    %988 = vxpose.xlu0.b32.cont [6/16] 0.0, 128
    %989 = vxpose.xlu0.b32.cont [7/16] 0.0, 128
    %990 = vxpose.xlu0.b32.cont [8/16] 0.0, 128
    %991 = vxpose.xlu0.b32.cont [9/16] 0.0, 128
    %992 = vxpose.xlu0.b32.cont [10/16] 0.0, 128
    %993 = vxpose.xlu0.b32.cont [11/16] 0.0, 128
    %994 = vxpose.xlu0.b32.cont [12/16] 0.0, 128
    %995 = vxpose.xlu0.b32.cont [13/16] 0.0, 128
    %996 = vxpose.xlu0.b32.cont [14/16] 0.0, 128
    %997 = vxpose.xlu0.b32.cont [15/16] 0.0, 128
    %998 = vxpose.xlu0.b32.end [16/16] 0.0, 128
    %v999 = vpop.trf.xlu0
    %v1000 = vpop.trf.xlu0
    %v1001 = vpop.trf.xlu0
    %v1002 = vpop.trf.xlu0
    %v1003 = vpop.trf.xlu0
    %v1004 = vpop.trf.xlu0
    %v1005 = vpop.trf.xlu0
    %v1006 = vpop.trf.xlu0
    %v1007 = vpop.trf.xlu0
    %v1008 = vpop.trf.xlu0
    %v1009 = vpop.trf.xlu0
    %v1010 = vpop.trf.xlu0
    %v1011 = vpop.trf.xlu0
    %v1012 = vpop.trf.xlu0
    %v1013 = vpop.trf.xlu0
    %v1014 = vpop.trf.xlu0
    %1015 = vxpose.xlu0.b32.start [1/16] %v490, 128
    %1016 = vxpose.xlu0.b32.cont [2/16] %v493, 128
    %1017 = vxpose.xlu0.b32.cont [3/16] 0.0, 128
    %1018 = vxpose.xlu0.b32.cont [4/16] 0.0, 128
    %1019 = vxpose.xlu0.b32.cont [5/16] 0.0, 128
    %1020 = vxpose.xlu0.b32.cont [6/16] 0.0, 128
    %1021 = vxpose.xlu0.b32.cont [7/16] 0.0, 128
    %1022 = vxpose.xlu0.b32.cont [8/16] 0.0, 128
    %1023 = vxpose.xlu0.b32.cont [9/16] 0.0, 128
    %1024 = vxpose.xlu0.b32.cont [10/16] 0.0, 128
    %1025 = vxpose.xlu0.b32.cont [11/16] 0.0, 128
    %1026 = vxpose.xlu0.b32.cont [12/16] 0.0, 128
    %1027 = vxpose.xlu0.b32.cont [13/16] 0.0, 128
    %1028 = vxpose.xlu0.b32.cont [14/16] 0.0, 128
    %1029 = vxpose.xlu0.b32.cont [15/16] 0.0, 128
    %1030 = vxpose.xlu0.b32.end [16/16] 0.0, 128
    %v1031 = vpop.trf.xlu0
    %v1032 = vpop.trf.xlu0
    %v1033 = vpop.trf.xlu0
    %v1034 = vpop.trf.xlu0
    %v1035 = vpop.trf.xlu0
    %v1036 = vpop.trf.xlu0
    %v1037 = vpop.trf.xlu0
    %v1038 = vpop.trf.xlu0
    %v1039 = vpop.trf.xlu0
    %v1040 = vpop.trf.xlu0
    %v1041 = vpop.trf.xlu0
    %v1042 = vpop.trf.xlu0
    %v1043 = vpop.trf.xlu0
    %v1044 = vpop.trf.xlu0
    %v1045 = vpop.trf.xlu0
    %v1046 = vpop.trf.xlu0
    %1047 = vxpose.xlu0.b32.start [1/16] %v496, 128
    %1048 = vxpose.xlu0.b32.cont [2/16] %v499, 128
    %1049 = vxpose.xlu0.b32.cont [3/16] 0.0, 128
    %1050 = vxpose.xlu0.b32.cont [4/16] 0.0, 128
    %1051 = vxpose.xlu0.b32.cont [5/16] 0.0, 128
    %1052 = vxpose.xlu0.b32.cont [6/16] 0.0, 128
    %1053 = vxpose.xlu0.b32.cont [7/16] 0.0, 128
    %1054 = vxpose.xlu0.b32.cont [8/16] 0.0, 128
    %1055 = vxpose.xlu0.b32.cont [9/16] 0.0, 128
    %1056 = vxpose.xlu0.b32.cont [10/16] 0.0, 128
    %1057 = vxpose.xlu0.b32.cont [11/16] 0.0, 128
    %1058 = vxpose.xlu0.b32.cont [12/16] 0.0, 128
    %1059 = vxpose.xlu0.b32.cont [13/16] 0.0, 128
    %1060 = vxpose.xlu0.b32.cont [14/16] 0.0, 128
    %1061 = vxpose.xlu0.b32.cont [15/16] 0.0, 128
    %1062 = vxpose.xlu0.b32.end [16/16] 0.0, 128
    %v1063 = vpop.trf.xlu0
    %v1064 = vpop.trf.xlu0
    %v1065 = vpop.trf.xlu0
    %v1066 = vpop.trf.xlu0
    %v1067 = vpop.trf.xlu0
    %v1068 = vpop.trf.xlu0
    %v1069 = vpop.trf.xlu0
    %v1070 = vpop.trf.xlu0
    %v1071 = vpop.trf.xlu0
    %v1072 = vpop.trf.xlu0
    %v1073 = vpop.trf.xlu0
    %v1074 = vpop.trf.xlu0
    %v1075 = vpop.trf.xlu0
    %v1076 = vpop.trf.xlu0
    %v1077 = vpop.trf.xlu0
    %v1078 = vpop.trf.xlu0
    %1079 = vxpose.xlu0.b32.start [1/16] %v502, 128
    %1080 = vxpose.xlu0.b32.cont [2/16] %v505, 128
    %1081 = vxpose.xlu0.b32.cont [3/16] 0.0, 128
    %1082 = vxpose.xlu0.b32.cont [4/16] 0.0, 128
    %1083 = vxpose.xlu0.b32.cont [5/16] 0.0, 128
    %1084 = vxpose.xlu0.b32.cont [6/16] 0.0, 128
    %1085 = vxpose.xlu0.b32.cont [7/16] 0.0, 128
    %1086 = vxpose.xlu0.b32.cont [8/16] 0.0, 128
    %1087 = vxpose.xlu0.b32.cont [9/16] 0.0, 128
    %1088 = vxpose.xlu0.b32.cont [10/16] 0.0, 128
    %1089 = vxpose.xlu0.b32.cont [11/16] 0.0, 128
    %1090 = vxpose.xlu0.b32.cont [12/16] 0.0, 128
    %1091 = vxpose.xlu0.b32.cont [13/16] 0.0, 128
    %1092 = vxpose.xlu0.b32.cont [14/16] 0.0, 128
    %1093 = vxpose.xlu0.b32.cont [15/16] 0.0, 128
    %1094 = vxpose.xlu0.b32.end [16/16] 0.0, 128
    %v1095 = vpop.trf.xlu0
    %v1096 = vpop.trf.xlu0
    %v1097 = vpop.trf.xlu0
    %v1098 = vpop.trf.xlu0
    %v1099 = vpop.trf.xlu0
    %v1100 = vpop.trf.xlu0
    %v1101 = vpop.trf.xlu0
    %v1102 = vpop.trf.xlu0
    %v1103 = vpop.trf.xlu0
    %v1104 = vpop.trf.xlu0
    %v1105 = vpop.trf.xlu0
    %v1106 = vpop.trf.xlu0
    %v1107 = vpop.trf.xlu0
    %v1108 = vpop.trf.xlu0
    %v1109 = vpop.trf.xlu0
    %v1110 = vpop.trf.xlu0
    %1111 = vxpose.xlu0.b32.start [1/16] %v508, 128
    %1112 = vxpose.xlu0.b32.cont [2/16] %v511, 128
    %1113 = vxpose.xlu0.b32.cont [3/16] 0.0, 128
    %1114 = vxpose.xlu0.b32.cont [4/16] 0.0, 128
    %1115 = vxpose.xlu0.b32.cont [5/16] 0.0, 128
    %1116 = vxpose.xlu0.b32.cont [6/16] 0.0, 128
    %1117 = vxpose.xlu0.b32.cont [7/16] 0.0, 128
    %1118 = vxpose.xlu0.b32.cont [8/16] 0.0, 128
    %1119 = vxpose.xlu0.b32.cont [9/16] 0.0, 128
    %1120 = vxpose.xlu0.b32.cont [10/16] 0.0, 128
    %1121 = vxpose.xlu0.b32.cont [11/16] 0.0, 128
    %1122 = vxpose.xlu0.b32.cont [12/16] 0.0, 128
    %1123 = vxpose.xlu0.b32.cont [13/16] 0.0, 128
    %1124 = vxpose.xlu0.b32.cont [14/16] 0.0, 128
    %1125 = vxpose.xlu0.b32.cont [15/16] 0.0, 128
    %1126 = vxpose.xlu0.b32.end [16/16] 0.0, 128
    %v1127 = vpop.trf.xlu0
    %v1128 = vpop.trf.xlu0
    %v1129 = vpop.trf.xlu0
    %v1130 = vpop.trf.xlu0
    %v1131 = vpop.trf.xlu0
    %v1132 = vpop.trf.xlu0
    %v1133 = vpop.trf.xlu0
    %v1134 = vpop.trf.xlu0
    %v1135 = vpop.trf.xlu0
    %v1136 = vpop.trf.xlu0
    %v1137 = vpop.trf.xlu0
    %v1138 = vpop.trf.xlu0
    %v1139 = vpop.trf.xlu0
    %v1140 = vpop.trf.xlu0
    %v1141 = vpop.trf.xlu0
    %v1142 = vpop.trf.xlu0
    %1143 = vxpose.xlu0.b32.start [1/16] %v514, 128
    %1144 = vxpose.xlu0.b32.cont [2/16] %v517, 128
    %1145 = vxpose.xlu0.b32.cont [3/16] 0.0, 128
    %1146 = vxpose.xlu0.b32.cont [4/16] 0.0, 128
    %1147 = vxpose.xlu0.b32.cont [5/16] 0.0, 128
    %1148 = vxpose.xlu0.b32.cont [6/16] 0.0, 128
    %1149 = vxpose.xlu0.b32.cont [7/16] 0.0, 128
    %1150 = vxpose.xlu0.b32.cont [8/16] 0.0, 128
    %1151 = vxpose.xlu0.b32.cont [9/16] 0.0, 128
    %1152 = vxpose.xlu0.b32.cont [10/16] 0.0, 128
    %1153 = vxpose.xlu0.b32.cont [11/16] 0.0, 128
    %1154 = vxpose.xlu0.b32.cont [12/16] 0.0, 128
    %1155 = vxpose.xlu0.b32.cont [13/16] 0.0, 128
    %1156 = vxpose.xlu0.b32.cont [14/16] 0.0, 128
    %1157 = vxpose.xlu0.b32.cont [15/16] 0.0, 128
    %1158 = vxpose.xlu0.b32.end [16/16] 0.0, 128
    %v1159 = vpop.trf.xlu0
    %v1160 = vpop.trf.xlu0
    %v1161 = vpop.trf.xlu0
    %v1162 = vpop.trf.xlu0
    %v1163 = vpop.trf.xlu0
    %v1164 = vpop.trf.xlu0
    %v1165 = vpop.trf.xlu0
    %v1166 = vpop.trf.xlu0
    %v1167 = vpop.trf.xlu0
    %v1168 = vpop.trf.xlu0
    %v1169 = vpop.trf.xlu0
    %v1170 = vpop.trf.xlu0
    %v1171 = vpop.trf.xlu0
    %v1172 = vpop.trf.xlu0
    %v1173 = vpop.trf.xlu0
    %v1174 = vpop.trf.xlu0
    %1175 = vxpose.xlu0.b32.start [1/16] %v520, 128
    %1176 = vxpose.xlu0.b32.cont [2/16] %v523, 128
    %1177 = vxpose.xlu0.b32.cont [3/16] 0.0, 128
    %1178 = vxpose.xlu0.b32.cont [4/16] 0.0, 128
    %1179 = vxpose.xlu0.b32.cont [5/16] 0.0, 128
    %1180 = vxpose.xlu0.b32.cont [6/16] 0.0, 128
    %1181 = vxpose.xlu0.b32.cont [7/16] 0.0, 128
    %1182 = vxpose.xlu0.b32.cont [8/16] 0.0, 128
    %1183 = vxpose.xlu0.b32.cont [9/16] 0.0, 128
    %1184 = vxpose.xlu0.b32.cont [10/16] 0.0, 128
    %1185 = vxpose.xlu0.b32.cont [11/16] 0.0, 128
    %1186 = vxpose.xlu0.b32.cont [12/16] 0.0, 128
    %1187 = vxpose.xlu0.b32.cont [13/16] 0.0, 128
    %1188 = vxpose.xlu0.b32.cont [14/16] 0.0, 128
    %1189 = vxpose.xlu0.b32.cont [15/16] 0.0, 128
    %1190 = vxpose.xlu0.b32.end [16/16] 0.0, 128
    %v1191 = vpop.trf.xlu0
    %v1192 = vpop.trf.xlu0
    %v1193 = vpop.trf.xlu0
    %v1194 = vpop.trf.xlu0
    %v1195 = vpop.trf.xlu0
    %v1196 = vpop.trf.xlu0
    %v1197 = vpop.trf.xlu0
    %v1198 = vpop.trf.xlu0
    %v1199 = vpop.trf.xlu0
    %v1200 = vpop.trf.xlu0
    %v1201 = vpop.trf.xlu0
    %v1202 = vpop.trf.xlu0
    %v1203 = vpop.trf.xlu0
    %v1204 = vpop.trf.xlu0
    %v1205 = vpop.trf.xlu0
    %v1206 = vpop.trf.xlu0
    %1207 = vxpose.xlu0.b32.start [1/16] %v526, 128
    %1208 = vxpose.xlu0.b32.cont [2/16] %v529, 128
    %1209 = vxpose.xlu0.b32.cont [3/16] 0.0, 128
    %1210 = vxpose.xlu0.b32.cont [4/16] 0.0, 128
    %1211 = vxpose.xlu0.b32.cont [5/16] 0.0, 128
    %1212 = vxpose.xlu0.b32.cont [6/16] 0.0, 128
    %1213 = vxpose.xlu0.b32.cont [7/16] 0.0, 128
    %1214 = vxpose.xlu0.b32.cont [8/16] 0.0, 128
    %1215 = vxpose.xlu0.b32.cont [9/16] 0.0, 128
    %1216 = vxpose.xlu0.b32.cont [10/16] 0.0, 128
    %1217 = vxpose.xlu0.b32.cont [11/16] 0.0, 128
    %1218 = vxpose.xlu0.b32.cont [12/16] 0.0, 128
    %1219 = vxpose.xlu0.b32.cont [13/16] 0.0, 128
    %1220 = vxpose.xlu0.b32.cont [14/16] 0.0, 128
    %1221 = vxpose.xlu0.b32.cont [15/16] 0.0, 128
    %1222 = vxpose.xlu0.b32.end [16/16] 0.0, 128
    %v1223 = vpop.trf.xlu0
    %v1224 = vpop.trf.xlu0
    %v1225 = vpop.trf.xlu0
    %v1226 = vpop.trf.xlu0
    %v1227 = vpop.trf.xlu0
    %v1228 = vpop.trf.xlu0
    %v1229 = vpop.trf.xlu0
    %v1230 = vpop.trf.xlu0
    %v1231 = vpop.trf.xlu0
    %v1232 = vpop.trf.xlu0
    %v1233 = vpop.trf.xlu0
    %v1234 = vpop.trf.xlu0
    %v1235 = vpop.trf.xlu0
    %v1236 = vpop.trf.xlu0
    %v1237 = vpop.trf.xlu0
    %v1238 = vpop.trf.xlu0
    %1239 = vxpose.xlu0.b32.start [1/16] %v532, 128
    %1240 = vxpose.xlu0.b32.cont [2/16] %v535, 128
    %1241 = vxpose.xlu0.b32.cont [3/16] 0.0, 128
    %1242 = vxpose.xlu0.b32.cont [4/16] 0.0, 128
    %1243 = vxpose.xlu0.b32.cont [5/16] 0.0, 128
    %1244 = vxpose.xlu0.b32.cont [6/16] 0.0, 128
    %1245 = vxpose.xlu0.b32.cont [7/16] 0.0, 128
    %1246 = vxpose.xlu0.b32.cont [8/16] 0.0, 128
    %1247 = vxpose.xlu0.b32.cont [9/16] 0.0, 128
    %1248 = vxpose.xlu0.b32.cont [10/16] 0.0, 128
    %1249 = vxpose.xlu0.b32.cont [11/16] 0.0, 128
    %1250 = vxpose.xlu0.b32.cont [12/16] 0.0, 128
    %1251 = vxpose.xlu0.b32.cont [13/16] 0.0, 128
    %1252 = vxpose.xlu0.b32.cont [14/16] 0.0, 128
    %1253 = vxpose.xlu0.b32.cont [15/16] 0.0, 128
    %1254 = vxpose.xlu0.b32.end [16/16] 0.0, 128
    %v1255 = vpop.trf.xlu0
    %v1256 = vpop.trf.xlu0
    %v1257 = vpop.trf.xlu0
    %v1258 = vpop.trf.xlu0
    %v1259 = vpop.trf.xlu0
    %v1260 = vpop.trf.xlu0
    %v1261 = vpop.trf.xlu0
    %v1262 = vpop.trf.xlu0
    %v1263 = vpop.trf.xlu0
    %v1264 = vpop.trf.xlu0
    %v1265 = vpop.trf.xlu0
    %v1266 = vpop.trf.xlu0
    %v1267 = vpop.trf.xlu0
    %v1268 = vpop.trf.xlu0
    %v1269 = vpop.trf.xlu0
    %v1270 = vpop.trf.xlu0
    %1271 = vxpose.xlu0.b32.start [1/16] %v538, 128
    %1272 = vxpose.xlu0.b32.cont [2/16] %v541, 128
    %1273 = vxpose.xlu0.b32.cont [3/16] 0.0, 128
    %1274 = vxpose.xlu0.b32.cont [4/16] 0.0, 128
    %1275 = vxpose.xlu0.b32.cont [5/16] 0.0, 128
    %1276 = vxpose.xlu0.b32.cont [6/16] 0.0, 128
    %1277 = vxpose.xlu0.b32.cont [7/16] 0.0, 128
    %1278 = vxpose.xlu0.b32.cont [8/16] 0.0, 128
    %1279 = vxpose.xlu0.b32.cont [9/16] 0.0, 128
    %1280 = vxpose.xlu0.b32.cont [10/16] 0.0, 128
    %1281 = vxpose.xlu0.b32.cont [11/16] 0.0, 128
    %1282 = vxpose.xlu0.b32.cont [12/16] 0.0, 128
    %1283 = vxpose.xlu0.b32.cont [13/16] 0.0, 128
    %1284 = vxpose.xlu0.b32.cont [14/16] 0.0, 128
    %1285 = vxpose.xlu0.b32.cont [15/16] 0.0, 128
    %1286 = vxpose.xlu0.b32.end [16/16] 0.0, 128
    %v1287 = vpop.trf.xlu0
    %v1288 = vpop.trf.xlu0
    %v1289 = vpop.trf.xlu0
    %v1290 = vpop.trf.xlu0
    %v1291 = vpop.trf.xlu0
    %v1292 = vpop.trf.xlu0
    %v1293 = vpop.trf.xlu0
    %v1294 = vpop.trf.xlu0
    %v1295 = vpop.trf.xlu0
    %v1296 = vpop.trf.xlu0
    %v1297 = vpop.trf.xlu0
    %v1298 = vpop.trf.xlu0
    %v1299 = vpop.trf.xlu0
    %v1300 = vpop.trf.xlu0
    %v1301 = vpop.trf.xlu0
    %v1302 = vpop.trf.xlu0
    %1303 = vxpose.xlu0.b32.start [1/16] %v544, 128
    %1304 = vxpose.xlu0.b32.cont [2/16] %v547, 128
    %1305 = vxpose.xlu0.b32.cont [3/16] 0.0, 128
    %1306 = vxpose.xlu0.b32.cont [4/16] 0.0, 128
    %1307 = vxpose.xlu0.b32.cont [5/16] 0.0, 128
    %1308 = vxpose.xlu0.b32.cont [6/16] 0.0, 128
    %1309 = vxpose.xlu0.b32.cont [7/16] 0.0, 128
    %1310 = vxpose.xlu0.b32.cont [8/16] 0.0, 128
    %1311 = vxpose.xlu0.b32.cont [9/16] 0.0, 128
    %1312 = vxpose.xlu0.b32.cont [10/16] 0.0, 128
    %1313 = vxpose.xlu0.b32.cont [11/16] 0.0, 128
    %1314 = vxpose.xlu0.b32.cont [12/16] 0.0, 128
    %1315 = vxpose.xlu0.b32.cont [13/16] 0.0, 128
    %1316 = vxpose.xlu0.b32.cont [14/16] 0.0, 128
    %1317 = vxpose.xlu0.b32.cont [15/16] 0.0, 128
    %1318 = vxpose.xlu0.b32.end [16/16] 0.0, 128
    %v1319 = vpop.trf.xlu0
    %v1320 = vpop.trf.xlu0
    %v1321 = vpop.trf.xlu0
    %v1322 = vpop.trf.xlu0
    %v1323 = vpop.trf.xlu0
    %v1324 = vpop.trf.xlu0
    %v1325 = vpop.trf.xlu0
    %v1326 = vpop.trf.xlu0
    %v1327 = vpop.trf.xlu0
    %v1328 = vpop.trf.xlu0
    %v1329 = vpop.trf.xlu0
    %v1330 = vpop.trf.xlu0
    %v1331 = vpop.trf.xlu0
    %v1332 = vpop.trf.xlu0
    %v1333 = vpop.trf.xlu0
    %v1334 = vpop.trf.xlu0
    %1335 = vxpose.xlu0.b32.start [1/16] %v550, 128
    %1336 = vxpose.xlu0.b32.cont [2/16] %v553, 128
    %1337 = vxpose.xlu0.b32.cont [3/16] 0.0, 128
    %1338 = vxpose.xlu0.b32.cont [4/16] 0.0, 128
    %1339 = vxpose.xlu0.b32.cont [5/16] 0.0, 128
    %1340 = vxpose.xlu0.b32.cont [6/16] 0.0, 128
    %1341 = vxpose.xlu0.b32.cont [7/16] 0.0, 128
    %1342 = vxpose.xlu0.b32.cont [8/16] 0.0, 128
    %1343 = vxpose.xlu0.b32.cont [9/16] 0.0, 128
    %1344 = vxpose.xlu0.b32.cont [10/16] 0.0, 128
    %1345 = vxpose.xlu0.b32.cont [11/16] 0.0, 128
    %1346 = vxpose.xlu0.b32.cont [12/16] 0.0, 128
    %1347 = vxpose.xlu0.b32.cont [13/16] 0.0, 128
    %1348 = vxpose.xlu0.b32.cont [14/16] 0.0, 128
    %1349 = vxpose.xlu0.b32.cont [15/16] 0.0, 128
    %1350 = vxpose.xlu0.b32.end [16/16] 0.0, 128
    %v1351 = vpop.trf.xlu0
    %v1352 = vpop.trf.xlu0
    %v1353 = vpop.trf.xlu0
    %v1354 = vpop.trf.xlu0
    %v1355 = vpop.trf.xlu0
    %v1356 = vpop.trf.xlu0
    %v1357 = vpop.trf.xlu0
    %v1358 = vpop.trf.xlu0
    %v1359 = vpop.trf.xlu0
    %v1360 = vpop.trf.xlu0
    %v1361 = vpop.trf.xlu0
    %v1362 = vpop.trf.xlu0
    %v1363 = vpop.trf.xlu0
    %v1364 = vpop.trf.xlu0
    %v1365 = vpop.trf.xlu0
    %v1366 = vpop.trf.xlu0
    %1367 = vxpose.xlu0.b32.start [1/16] %v556, 128
    %1368 = vxpose.xlu0.b32.cont [2/16] %v559, 128
    %1369 = vxpose.xlu0.b32.cont [3/16] 0.0, 128
    %1370 = vxpose.xlu0.b32.cont [4/16] 0.0, 128
    %1371 = vxpose.xlu0.b32.cont [5/16] 0.0, 128
    %1372 = vxpose.xlu0.b32.cont [6/16] 0.0, 128
    %1373 = vxpose.xlu0.b32.cont [7/16] 0.0, 128
    %1374 = vxpose.xlu0.b32.cont [8/16] 0.0, 128
    %1375 = vxpose.xlu0.b32.cont [9/16] 0.0, 128
    %1376 = vxpose.xlu0.b32.cont [10/16] 0.0, 128
    %1377 = vxpose.xlu0.b32.cont [11/16] 0.0, 128
    %1378 = vxpose.xlu0.b32.cont [12/16] 0.0, 128
    %1379 = vxpose.xlu0.b32.cont [13/16] 0.0, 128
    %1380 = vxpose.xlu0.b32.cont [14/16] 0.0, 128
    %1381 = vxpose.xlu0.b32.cont [15/16] 0.0, 128
    %1382 = vxpose.xlu0.b32.end [16/16] 0.0, 128
    %v1383 = vpop.trf.xlu0
    %v1384 = vpop.trf.xlu0
    %v1385 = vpop.trf.xlu0
    %v1386 = vpop.trf.xlu0
    %v1387 = vpop.trf.xlu0
    %v1388 = vpop.trf.xlu0
    %v1389 = vpop.trf.xlu0
    %v1390 = vpop.trf.xlu0
    %v1391 = vpop.trf.xlu0
    %v1392 = vpop.trf.xlu0
    %v1393 = vpop.trf.xlu0
    %v1394 = vpop.trf.xlu0
    %v1395 = vpop.trf.xlu0
    %v1396 = vpop.trf.xlu0
    %v1397 = vpop.trf.xlu0
    %v1398 = vpop.trf.xlu0
    %1399 = vxpose.xlu0.b32.start [1/16] %v562, 128
    %1400 = vxpose.xlu0.b32.cont [2/16] %v565, 128
    %1401 = vxpose.xlu0.b32.cont [3/16] 0.0, 128
    %1402 = vxpose.xlu0.b32.cont [4/16] 0.0, 128
    %1403 = vxpose.xlu0.b32.cont [5/16] 0.0, 128
    %1404 = vxpose.xlu0.b32.cont [6/16] 0.0, 128
    %1405 = vxpose.xlu0.b32.cont [7/16] 0.0, 128
    %1406 = vxpose.xlu0.b32.cont [8/16] 0.0, 128
    %1407 = vxpose.xlu0.b32.cont [9/16] 0.0, 128
    %1408 = vxpose.xlu0.b32.cont [10/16] 0.0, 128
    %1409 = vxpose.xlu0.b32.cont [11/16] 0.0, 128
    %1410 = vxpose.xlu0.b32.cont [12/16] 0.0, 128
    %1411 = vxpose.xlu0.b32.cont [13/16] 0.0, 128
    %1412 = vxpose.xlu0.b32.cont [14/16] 0.0, 128
    %1413 = vxpose.xlu0.b32.cont [15/16] 0.0, 128
    %1414 = vxpose.xlu0.b32.end [16/16] 0.0, 128
    %v1415 = vpop.trf.xlu0
    %v1416 = vpop.trf.xlu0
    %v1417 = vpop.trf.xlu0
    %v1418 = vpop.trf.xlu0
    %v1419 = vpop.trf.xlu0
    %v1420 = vpop.trf.xlu0
    %v1421 = vpop.trf.xlu0
    %v1422 = vpop.trf.xlu0
    %v1423 = vpop.trf.xlu0
    %v1424 = vpop.trf.xlu0
    %v1425 = vpop.trf.xlu0
    %v1426 = vpop.trf.xlu0
    %v1427 = vpop.trf.xlu0
    %v1428 = vpop.trf.xlu0
    %v1429 = vpop.trf.xlu0
    %v1430 = vpop.trf.xlu0
    %1431 = vxpose.xlu0.b32.start [1/16] %v568, 128
    %1432 = vxpose.xlu0.b32.cont [2/16] %v571, 128
    %1433 = vxpose.xlu0.b32.cont [3/16] 0.0, 128
    %1434 = vxpose.xlu0.b32.cont [4/16] 0.0, 128
    %1435 = vxpose.xlu0.b32.cont [5/16] 0.0, 128
    %1436 = vxpose.xlu0.b32.cont [6/16] 0.0, 128
    %1437 = vxpose.xlu0.b32.cont [7/16] 0.0, 128
    %1438 = vxpose.xlu0.b32.cont [8/16] 0.0, 128
    %1439 = vxpose.xlu0.b32.cont [9/16] 0.0, 128
    %1440 = vxpose.xlu0.b32.cont [10/16] 0.0, 128
    %1441 = vxpose.xlu0.b32.cont [11/16] 0.0, 128
    %1442 = vxpose.xlu0.b32.cont [12/16] 0.0, 128
    %1443 = vxpose.xlu0.b32.cont [13/16] 0.0, 128
    %1444 = vxpose.xlu0.b32.cont [14/16] 0.0, 128
    %1445 = vxpose.xlu0.b32.cont [15/16] 0.0, 128
    %1446 = vxpose.xlu0.b32.end [16/16] 0.0, 128
    %v1447 = vpop.trf.xlu0
    %v1448 = vpop.trf.xlu0
    %v1449 = vpop.trf.xlu0
    %v1450 = vpop.trf.xlu0
    %v1451 = vpop.trf.xlu0
    %v1452 = vpop.trf.xlu0
    %v1453 = vpop.trf.xlu0
    %v1454 = vpop.trf.xlu0
    %v1455 = vpop.trf.xlu0
    %v1456 = vpop.trf.xlu0
    %v1457 = vpop.trf.xlu0
    %v1458 = vpop.trf.xlu0
    %v1459 = vpop.trf.xlu0
    %v1460 = vpop.trf.xlu0
    %v1461 = vpop.trf.xlu0
    %v1462 = vpop.trf.xlu0
    %1463 = vxpose.xlu0.b32.start [1/16] %v574, 128
    %1464 = vxpose.xlu0.b32.cont [2/16] %v577, 128
    %1465 = vxpose.xlu0.b32.cont [3/16] 0.0, 128
    %1466 = vxpose.xlu0.b32.cont [4/16] 0.0, 128
    %1467 = vxpose.xlu0.b32.cont [5/16] 0.0, 128
    %1468 = vxpose.xlu0.b32.cont [6/16] 0.0, 128
    %1469 = vxpose.xlu0.b32.cont [7/16] 0.0, 128
    %1470 = vxpose.xlu0.b32.cont [8/16] 0.0, 128
    %1471 = vxpose.xlu0.b32.cont [9/16] 0.0, 128
    %1472 = vxpose.xlu0.b32.cont [10/16] 0.0, 128
    %1473 = vxpose.xlu0.b32.cont [11/16] 0.0, 128
    %1474 = vxpose.xlu0.b32.cont [12/16] 0.0, 128
    %1475 = vxpose.xlu0.b32.cont [13/16] 0.0, 128
    %1476 = vxpose.xlu0.b32.cont [14/16] 0.0, 128
    %1477 = vxpose.xlu0.b32.cont [15/16] 0.0, 128
    %1478 = vxpose.xlu0.b32.end [16/16] 0.0, 128
    %v1479 = vpop.trf.xlu0
    %v1480 = vpop.trf.xlu0
    %v1481 = vpop.trf.xlu0
    %v1482 = vpop.trf.xlu0
    %v1483 = vpop.trf.xlu0
    %v1484 = vpop.trf.xlu0
    %v1485 = vpop.trf.xlu0
    %v1486 = vpop.trf.xlu0
    %v1487 = vpop.trf.xlu0
    %v1488 = vpop.trf.xlu0
    %v1489 = vpop.trf.xlu0
    %v1490 = vpop.trf.xlu0
    %v1491 = vpop.trf.xlu0
    %v1492 = vpop.trf.xlu0
    %v1493 = vpop.trf.xlu0
    %v1494 = vpop.trf.xlu0
    %1495 = vxpose.xlu0.b32.start [1/16] %v580, 128
    %1496 = vxpose.xlu0.b32.cont [2/16] %v583, 128
    %1497 = vxpose.xlu0.b32.cont [3/16] 0.0, 128
    %1498 = vxpose.xlu0.b32.cont [4/16] 0.0, 128
    %1499 = vxpose.xlu0.b32.cont [5/16] 0.0, 128
    %1500 = vxpose.xlu0.b32.cont [6/16] 0.0, 128
    %1501 = vxpose.xlu0.b32.cont [7/16] 0.0, 128
    %1502 = vxpose.xlu0.b32.cont [8/16] 0.0, 128
    %1503 = vxpose.xlu0.b32.cont [9/16] 0.0, 128
    %1504 = vxpose.xlu0.b32.cont [10/16] 0.0, 128
    %1505 = vxpose.xlu0.b32.cont [11/16] 0.0, 128
    %1506 = vxpose.xlu0.b32.cont [12/16] 0.0, 128
    %1507 = vxpose.xlu0.b32.cont [13/16] 0.0, 128
    %1508 = vxpose.xlu0.b32.cont [14/16] 0.0, 128
    %1509 = vxpose.xlu0.b32.cont [15/16] 0.0, 128
    %1510 = vxpose.xlu0.b32.end [16/16] 0.0, 128
    %v1511 = vpop.trf.xlu0
    %v1512 = vpop.trf.xlu0
    %v1513 = vpop.trf.xlu0
    %v1514 = vpop.trf.xlu0
    %v1515 = vpop.trf.xlu0
    %v1516 = vpop.trf.xlu0
    %v1517 = vpop.trf.xlu0
    %v1518 = vpop.trf.xlu0
    %v1519 = vpop.trf.xlu0
    %v1520 = vpop.trf.xlu0
    %v1521 = vpop.trf.xlu0
    %v1522 = vpop.trf.xlu0
    %v1523 = vpop.trf.xlu0
    %v1524 = vpop.trf.xlu0
    %v1525 = vpop.trf.xlu0
    %v1526 = vpop.trf.xlu0
    %1527 = vxpose.xlu0.b32.start [1/16] %v586, 128
    %1528 = vxpose.xlu0.b32.cont [2/16] %v589, 128
    %1529 = vxpose.xlu0.b32.cont [3/16] 0.0, 128
    %1530 = vxpose.xlu0.b32.cont [4/16] 0.0, 128
    %1531 = vxpose.xlu0.b32.cont [5/16] 0.0, 128
    %1532 = vxpose.xlu0.b32.cont [6/16] 0.0, 128
    %1533 = vxpose.xlu0.b32.cont [7/16] 0.0, 128
    %1534 = vxpose.xlu0.b32.cont [8/16] 0.0, 128
    %1535 = vxpose.xlu0.b32.cont [9/16] 0.0, 128
    %1536 = vxpose.xlu0.b32.cont [10/16] 0.0, 128
    %1537 = vxpose.xlu0.b32.cont [11/16] 0.0, 128
    %1538 = vxpose.xlu0.b32.cont [12/16] 0.0, 128
    %1539 = vxpose.xlu0.b32.cont [13/16] 0.0, 128
    %1540 = vxpose.xlu0.b32.cont [14/16] 0.0, 128
    %1541 = vxpose.xlu0.b32.cont [15/16] 0.0, 128
    %1542 = vxpose.xlu0.b32.end [16/16] 0.0, 128
    %v1543 = vpop.trf.xlu0
    %v1544 = vpop.trf.xlu0
    %v1545 = vpop.trf.xlu0
    %v1546 = vpop.trf.xlu0
    %v1547 = vpop.trf.xlu0
    %v1548 = vpop.trf.xlu0
    %v1549 = vpop.trf.xlu0
    %v1550 = vpop.trf.xlu0
    %v1551 = vpop.trf.xlu0
    %v1552 = vpop.trf.xlu0
    %v1553 = vpop.trf.xlu0
    %v1554 = vpop.trf.xlu0
    %v1555 = vpop.trf.xlu0
    %v1556 = vpop.trf.xlu0
    %v1557 = vpop.trf.xlu0
    %v1558 = vpop.trf.xlu0
    %1559 = vxpose.xlu0.b32.start [1/16] %v592, 128
    %1560 = vxpose.xlu0.b32.cont [2/16] %v595, 128
    %1561 = vxpose.xlu0.b32.cont [3/16] 0.0, 128
    %1562 = vxpose.xlu0.b32.cont [4/16] 0.0, 128
    %1563 = vxpose.xlu0.b32.cont [5/16] 0.0, 128
    %1564 = vxpose.xlu0.b32.cont [6/16] 0.0, 128
    %1565 = vxpose.xlu0.b32.cont [7/16] 0.0, 128
    %1566 = vxpose.xlu0.b32.cont [8/16] 0.0, 128
    %1567 = vxpose.xlu0.b32.cont [9/16] 0.0, 128
    %1568 = vxpose.xlu0.b32.cont [10/16] 0.0, 128
    %1569 = vxpose.xlu0.b32.cont [11/16] 0.0, 128
    %1570 = vxpose.xlu0.b32.cont [12/16] 0.0, 128
    %1571 = vxpose.xlu0.b32.cont [13/16] 0.0, 128
    %1572 = vxpose.xlu0.b32.cont [14/16] 0.0, 128
    %1573 = vxpose.xlu0.b32.cont [15/16] 0.0, 128
    %1574 = vxpose.xlu0.b32.end [16/16] 0.0, 128
    %v1575 = vpop.trf.xlu0
    %v1576 = vpop.trf.xlu0
    %v1577 = vpop.trf.xlu0
    %v1578 = vpop.trf.xlu0
    %v1579 = vpop.trf.xlu0
    %v1580 = vpop.trf.xlu0
    %v1581 = vpop.trf.xlu0
    %v1582 = vpop.trf.xlu0
    %v1583 = vpop.trf.xlu0
    %v1584 = vpop.trf.xlu0
    %v1585 = vpop.trf.xlu0
    %v1586 = vpop.trf.xlu0
    %v1587 = vpop.trf.xlu0
    %v1588 = vpop.trf.xlu0
    %v1589 = vpop.trf.xlu0
    %v1590 = vpop.trf.xlu0
    %1591 = vxpose.xlu0.b32.start [1/16] %v598, 128
    %1592 = vxpose.xlu0.b32.cont [2/16] %v601, 128
    %1593 = vxpose.xlu0.b32.cont [3/16] 0.0, 128
    %1594 = vxpose.xlu0.b32.cont [4/16] 0.0, 128
    %1595 = vxpose.xlu0.b32.cont [5/16] 0.0, 128
    %1596 = vxpose.xlu0.b32.cont [6/16] 0.0, 128
    %1597 = vxpose.xlu0.b32.cont [7/16] 0.0, 128
    %1598 = vxpose.xlu0.b32.cont [8/16] 0.0, 128
    %1599 = vxpose.xlu0.b32.cont [9/16] 0.0, 128
    %1600 = vxpose.xlu0.b32.cont [10/16] 0.0, 128
    %1601 = vxpose.xlu0.b32.cont [11/16] 0.0, 128
    %1602 = vxpose.xlu0.b32.cont [12/16] 0.0, 128
    %1603 = vxpose.xlu0.b32.cont [13/16] 0.0, 128
    %1604 = vxpose.xlu0.b32.cont [14/16] 0.0, 128
    %1605 = vxpose.xlu0.b32.cont [15/16] 0.0, 128
    %1606 = vxpose.xlu0.b32.end [16/16] 0.0, 128
    %v1607 = vpop.trf.xlu0
    %v1608 = vpop.trf.xlu0
    %v1609 = vpop.trf.xlu0
    %v1610 = vpop.trf.xlu0
    %v1611 = vpop.trf.xlu0
    %v1612 = vpop.trf.xlu0
    %v1613 = vpop.trf.xlu0
    %v1614 = vpop.trf.xlu0
    %v1615 = vpop.trf.xlu0
    %v1616 = vpop.trf.xlu0
    %v1617 = vpop.trf.xlu0
    %v1618 = vpop.trf.xlu0
    %v1619 = vpop.trf.xlu0
    %v1620 = vpop.trf.xlu0
    %v1621 = vpop.trf.xlu0
    %v1622 = vpop.trf.xlu0
    %1623 = vxpose.xlu0.b32.start [1/16] %v604, 128
    %1624 = vxpose.xlu0.b32.cont [2/16] %v607, 128
    %1625 = vxpose.xlu0.b32.cont [3/16] 0.0, 128
    %1626 = vxpose.xlu0.b32.cont [4/16] 0.0, 128
    %1627 = vxpose.xlu0.b32.cont [5/16] 0.0, 128
    %1628 = vxpose.xlu0.b32.cont [6/16] 0.0, 128
    %1629 = vxpose.xlu0.b32.cont [7/16] 0.0, 128
    %1630 = vxpose.xlu0.b32.cont [8/16] 0.0, 128
    %1631 = vxpose.xlu0.b32.cont [9/16] 0.0, 128
    %1632 = vxpose.xlu0.b32.cont [10/16] 0.0, 128
    %1633 = vxpose.xlu0.b32.cont [11/16] 0.0, 128
    %1634 = vxpose.xlu0.b32.cont [12/16] 0.0, 128
    %1635 = vxpose.xlu0.b32.cont [13/16] 0.0, 128
    %1636 = vxpose.xlu0.b32.cont [14/16] 0.0, 128
    %1637 = vxpose.xlu0.b32.cont [15/16] 0.0, 128
    %1638 = vxpose.xlu0.b32.end [16/16] 0.0, 128
    %v1639 = vpop.trf.xlu0
    %v1640 = vpop.trf.xlu0
    %v1641 = vpop.trf.xlu0
    %v1642 = vpop.trf.xlu0
    %v1643 = vpop.trf.xlu0
    %v1644 = vpop.trf.xlu0
    %v1645 = vpop.trf.xlu0
    %v1646 = vpop.trf.xlu0
    %v1647 = vpop.trf.xlu0
    %v1648 = vpop.trf.xlu0
    %v1649 = vpop.trf.xlu0
    %v1650 = vpop.trf.xlu0
    %v1651 = vpop.trf.xlu0
    %v1652 = vpop.trf.xlu0
    %v1653 = vpop.trf.xlu0
    %v1654 = vpop.trf.xlu0
    %1655 = vxpose.xlu0.b32.start [1/16] %v610, 128
    %1656 = vxpose.xlu0.b32.cont [2/16] %v613, 128
    %1657 = vxpose.xlu0.b32.cont [3/16] 0.0, 128
    %1658 = vxpose.xlu0.b32.cont [4/16] 0.0, 128
    %1659 = vxpose.xlu0.b32.cont [5/16] 0.0, 128
    %1660 = vxpose.xlu0.b32.cont [6/16] 0.0, 128
    %1661 = vxpose.xlu0.b32.cont [7/16] 0.0, 128
    %1662 = vxpose.xlu0.b32.cont [8/16] 0.0, 128
    %1663 = vxpose.xlu0.b32.cont [9/16] 0.0, 128
    %1664 = vxpose.xlu0.b32.cont [10/16] 0.0, 128
    %1665 = vxpose.xlu0.b32.cont [11/16] 0.0, 128
    %1666 = vxpose.xlu0.b32.cont [12/16] 0.0, 128
    %1667 = vxpose.xlu0.b32.cont [13/16] 0.0, 128
    %1668 = vxpose.xlu0.b32.cont [14/16] 0.0, 128
    %1669 = vxpose.xlu0.b32.cont [15/16] 0.0, 128
    %1670 = vxpose.xlu0.b32.end [16/16] 0.0, 128
    %v1671 = vpop.trf.xlu0
    %v1672 = vpop.trf.xlu0
    %v1673 = vpop.trf.xlu0
    %v1674 = vpop.trf.xlu0
    %v1675 = vpop.trf.xlu0
    %v1676 = vpop.trf.xlu0
    %v1677 = vpop.trf.xlu0
    %v1678 = vpop.trf.xlu0
    %v1679 = vpop.trf.xlu0
    %v1680 = vpop.trf.xlu0
    %v1681 = vpop.trf.xlu0
    %v1682 = vpop.trf.xlu0
    %v1683 = vpop.trf.xlu0
    %v1684 = vpop.trf.xlu0
    %v1685 = vpop.trf.xlu0
    %v1686 = vpop.trf.xlu0
    %1687 = vxpose.xlu0.b32.start [1/16] %v616, 128
    %1688 = vxpose.xlu0.b32.cont [2/16] %v619, 128
    %1689 = vxpose.xlu0.b32.cont [3/16] 0.0, 128
    %1690 = vxpose.xlu0.b32.cont [4/16] 0.0, 128
    %1691 = vxpose.xlu0.b32.cont [5/16] 0.0, 128
    %1692 = vxpose.xlu0.b32.cont [6/16] 0.0, 128
    %1693 = vxpose.xlu0.b32.cont [7/16] 0.0, 128
    %1694 = vxpose.xlu0.b32.cont [8/16] 0.0, 128
    %1695 = vxpose.xlu0.b32.cont [9/16] 0.0, 128
    %1696 = vxpose.xlu0.b32.cont [10/16] 0.0, 128
    %1697 = vxpose.xlu0.b32.cont [11/16] 0.0, 128
    %1698 = vxpose.xlu0.b32.cont [12/16] 0.0, 128
    %1699 = vxpose.xlu0.b32.cont [13/16] 0.0, 128
    %1700 = vxpose.xlu0.b32.cont [14/16] 0.0, 128
    %1701 = vxpose.xlu0.b32.cont [15/16] 0.0, 128
    %1702 = vxpose.xlu0.b32.end [16/16] 0.0, 128
    %v1703 = vpop.trf.xlu0
    %v1704 = vpop.trf.xlu0
    %v1705 = vpop.trf.xlu0
    %v1706 = vpop.trf.xlu0
    %v1707 = vpop.trf.xlu0
    %v1708 = vpop.trf.xlu0
    %v1709 = vpop.trf.xlu0
    %v1710 = vpop.trf.xlu0
    %v1711 = vpop.trf.xlu0
    %v1712 = vpop.trf.xlu0
    %v1713 = vpop.trf.xlu0
    %v1714 = vpop.trf.xlu0
    %v1715 = vpop.trf.xlu0
    %v1716 = vpop.trf.xlu0
    %v1717 = vpop.trf.xlu0
    %v1718 = vpop.trf.xlu0
    %1719 = vxpose.xlu0.b32.start [1/16] %v622, 128
    %1720 = vxpose.xlu0.b32.cont [2/16] %v625, 128
    %1721 = vxpose.xlu0.b32.cont [3/16] 0.0, 128
    %1722 = vxpose.xlu0.b32.cont [4/16] 0.0, 128
    %1723 = vxpose.xlu0.b32.cont [5/16] 0.0, 128
    %1724 = vxpose.xlu0.b32.cont [6/16] 0.0, 128
    %1725 = vxpose.xlu0.b32.cont [7/16] 0.0, 128
    %1726 = vxpose.xlu0.b32.cont [8/16] 0.0, 128
    %1727 = vxpose.xlu0.b32.cont [9/16] 0.0, 128
    %1728 = vxpose.xlu0.b32.cont [10/16] 0.0, 128
    %1729 = vxpose.xlu0.b32.cont [11/16] 0.0, 128
    %1730 = vxpose.xlu0.b32.cont [12/16] 0.0, 128
    %1731 = vxpose.xlu0.b32.cont [13/16] 0.0, 128
    %1732 = vxpose.xlu0.b32.cont [14/16] 0.0, 128
    %1733 = vxpose.xlu0.b32.cont [15/16] 0.0, 128
    %1734 = vxpose.xlu0.b32.end [16/16] 0.0, 128
    %v1735 = vpop.trf.xlu0
    %v1736 = vpop.trf.xlu0
    %v1737 = vpop.trf.xlu0
    %v1738 = vpop.trf.xlu0
    %v1739 = vpop.trf.xlu0
    %v1740 = vpop.trf.xlu0
    %v1741 = vpop.trf.xlu0
    %v1742 = vpop.trf.xlu0
    %v1743 = vpop.trf.xlu0
    %v1744 = vpop.trf.xlu0
    %v1745 = vpop.trf.xlu0
    %v1746 = vpop.trf.xlu0
    %v1747 = vpop.trf.xlu0
    %v1748 = vpop.trf.xlu0
    %v1749 = vpop.trf.xlu0
    %v1750 = vpop.trf.xlu0
    %1751 = vxpose.xlu0.b32.start [1/16] %v628, 128
    %1752 = vxpose.xlu0.b32.cont [2/16] %v631, 128
    %1753 = vxpose.xlu0.b32.cont [3/16] 0.0, 128
    %1754 = vxpose.xlu0.b32.cont [4/16] 0.0, 128
    %1755 = vxpose.xlu0.b32.cont [5/16] 0.0, 128
    %1756 = vxpose.xlu0.b32.cont [6/16] 0.0, 128
    %1757 = vxpose.xlu0.b32.cont [7/16] 0.0, 128
    %1758 = vxpose.xlu0.b32.cont [8/16] 0.0, 128
    %1759 = vxpose.xlu0.b32.cont [9/16] 0.0, 128
    %1760 = vxpose.xlu0.b32.cont [10/16] 0.0, 128
    %1761 = vxpose.xlu0.b32.cont [11/16] 0.0, 128
    %1762 = vxpose.xlu0.b32.cont [12/16] 0.0, 128
    %1763 = vxpose.xlu0.b32.cont [13/16] 0.0, 128
    %1764 = vxpose.xlu0.b32.cont [14/16] 0.0, 128
    %1765 = vxpose.xlu0.b32.cont [15/16] 0.0, 128
    %1766 = vxpose.xlu0.b32.end [16/16] 0.0, 128
    %v1767 = vpop.trf.xlu0
    %v1768 = vpop.trf.xlu0
    %v1769 = vpop.trf.xlu0
    %v1770 = vpop.trf.xlu0
    %v1771 = vpop.trf.xlu0
    %v1772 = vpop.trf.xlu0
    %v1773 = vpop.trf.xlu0
    %v1774 = vpop.trf.xlu0
    %v1775 = vpop.trf.xlu0
    %v1776 = vpop.trf.xlu0
    %v1777 = vpop.trf.xlu0
    %v1778 = vpop.trf.xlu0
    %v1779 = vpop.trf.xlu0
    %v1780 = vpop.trf.xlu0
    %v1781 = vpop.trf.xlu0
    %v1782 = vpop.trf.xlu0
    %1783 = vxpose.xlu0.b32.start [1/16] %v634, 128
    %1784 = vxpose.xlu0.b32.cont [2/16] %v637, 128
    %1785 = vxpose.xlu0.b32.cont [3/16] 0.0, 128
    %1786 = vxpose.xlu0.b32.cont [4/16] 0.0, 128
    %1787 = vxpose.xlu0.b32.cont [5/16] 0.0, 128
    %1788 = vxpose.xlu0.b32.cont [6/16] 0.0, 128
    %1789 = vxpose.xlu0.b32.cont [7/16] 0.0, 128
    %1790 = vxpose.xlu0.b32.cont [8/16] 0.0, 128
    %1791 = vxpose.xlu0.b32.cont [9/16] 0.0, 128
    %1792 = vxpose.xlu0.b32.cont [10/16] 0.0, 128
    %1793 = vxpose.xlu0.b32.cont [11/16] 0.0, 128
    %1794 = vxpose.xlu0.b32.cont [12/16] 0.0, 128
    %1795 = vxpose.xlu0.b32.cont [13/16] 0.0, 128
    %1796 = vxpose.xlu0.b32.cont [14/16] 0.0, 128
    %1797 = vxpose.xlu0.b32.cont [15/16] 0.0, 128
    %1798 = vxpose.xlu0.b32.end [16/16] 0.0, 128
    %v1799 = vpop.trf.xlu0
    %v1800 = vpop.trf.xlu0
    %v1801 = vpop.trf.xlu0
    %v1802 = vpop.trf.xlu0
    %v1803 = vpop.trf.xlu0
    %v1804 = vpop.trf.xlu0
    %v1805 = vpop.trf.xlu0
    %v1806 = vpop.trf.xlu0
    %v1807 = vpop.trf.xlu0
    %v1808 = vpop.trf.xlu0
    %v1809 = vpop.trf.xlu0
    %v1810 = vpop.trf.xlu0
    %v1811 = vpop.trf.xlu0
    %v1812 = vpop.trf.xlu0
    %v1813 = vpop.trf.xlu0
    %v1814 = vpop.trf.xlu0
    %1815 = vxpose.xlu0.b32.start [1/16] %v640, 128
    %1816 = vxpose.xlu0.b32.cont [2/16] %v643, 128
    %1817 = vxpose.xlu0.b32.cont [3/16] 0.0, 128
    %1818 = vxpose.xlu0.b32.cont [4/16] 0.0, 128
    %1819 = vxpose.xlu0.b32.cont [5/16] 0.0, 128
    %1820 = vxpose.xlu0.b32.cont [6/16] 0.0, 128
    %1821 = vxpose.xlu0.b32.cont [7/16] 0.0, 128
    %1822 = vxpose.xlu0.b32.cont [8/16] 0.0, 128
    %1823 = vxpose.xlu0.b32.cont [9/16] 0.0, 128
    %1824 = vxpose.xlu0.b32.cont [10/16] 0.0, 128
    %1825 = vxpose.xlu0.b32.cont [11/16] 0.0, 128
    %1826 = vxpose.xlu0.b32.cont [12/16] 0.0, 128
    %1827 = vxpose.xlu0.b32.cont [13/16] 0.0, 128
    %1828 = vxpose.xlu0.b32.cont [14/16] 0.0, 128
    %1829 = vxpose.xlu0.b32.cont [15/16] 0.0, 128
    %1830 = vxpose.xlu0.b32.end [16/16] 0.0, 128
    %v1831 = vpop.trf.xlu0
    %v1832 = vpop.trf.xlu0
    %v1833 = vpop.trf.xlu0
    %v1834 = vpop.trf.xlu0
    %v1835 = vpop.trf.xlu0
    %v1836 = vpop.trf.xlu0
    %v1837 = vpop.trf.xlu0
    %v1838 = vpop.trf.xlu0
    %v1839 = vpop.trf.xlu0
    %v1840 = vpop.trf.xlu0
    %v1841 = vpop.trf.xlu0
    %v1842 = vpop.trf.xlu0
    %v1843 = vpop.trf.xlu0
    %v1844 = vpop.trf.xlu0
    %v1845 = vpop.trf.xlu0
    %v1846 = vpop.trf.xlu0
    %1847 = vxpose.xlu0.b32.start [1/16] %v646, 128
    %1848 = vxpose.xlu0.b32.cont [2/16] %v649, 128
    %1849 = vxpose.xlu0.b32.cont [3/16] 0.0, 128
    %1850 = vxpose.xlu0.b32.cont [4/16] 0.0, 128
    %1851 = vxpose.xlu0.b32.cont [5/16] 0.0, 128
    %1852 = vxpose.xlu0.b32.cont [6/16] 0.0, 128
    %1853 = vxpose.xlu0.b32.cont [7/16] 0.0, 128
    %1854 = vxpose.xlu0.b32.cont [8/16] 0.0, 128
    %1855 = vxpose.xlu0.b32.cont [9/16] 0.0, 128
    %1856 = vxpose.xlu0.b32.cont [10/16] 0.0, 128
    %1857 = vxpose.xlu0.b32.cont [11/16] 0.0, 128
    %1858 = vxpose.xlu0.b32.cont [12/16] 0.0, 128
    %1859 = vxpose.xlu0.b32.cont [13/16] 0.0, 128
    %1860 = vxpose.xlu0.b32.cont [14/16] 0.0, 128
    %1861 = vxpose.xlu0.b32.cont [15/16] 0.0, 128
    %1862 = vxpose.xlu0.b32.end [16/16] 0.0, 128
    %v1863 = vpop.trf.xlu0
    %v1864 = vpop.trf.xlu0
    %v1865 = vpop.trf.xlu0
    %v1866 = vpop.trf.xlu0
    %v1867 = vpop.trf.xlu0
    %v1868 = vpop.trf.xlu0
    %v1869 = vpop.trf.xlu0
    %v1870 = vpop.trf.xlu0
    %v1871 = vpop.trf.xlu0
    %v1872 = vpop.trf.xlu0
    %v1873 = vpop.trf.xlu0
    %v1874 = vpop.trf.xlu0
    %v1875 = vpop.trf.xlu0
    %v1876 = vpop.trf.xlu0
    %v1877 = vpop.trf.xlu0
    %v1878 = vpop.trf.xlu0
    %1879 = vxpose.xlu0.b32.start [1/16] %v652, 128
    %1880 = vxpose.xlu0.b32.cont [2/16] %v655, 128
    %1881 = vxpose.xlu0.b32.cont [3/16] 0.0, 128
    %1882 = vxpose.xlu0.b32.cont [4/16] 0.0, 128
    %1883 = vxpose.xlu0.b32.cont [5/16] 0.0, 128
    %1884 = vxpose.xlu0.b32.cont [6/16] 0.0, 128
    %1885 = vxpose.xlu0.b32.cont [7/16] 0.0, 128
    %1886 = vxpose.xlu0.b32.cont [8/16] 0.0, 128
    %1887 = vxpose.xlu0.b32.cont [9/16] 0.0, 128
    %1888 = vxpose.xlu0.b32.cont [10/16] 0.0, 128
    %1889 = vxpose.xlu0.b32.cont [11/16] 0.0, 128
    %1890 = vxpose.xlu0.b32.cont [12/16] 0.0, 128
    %1891 = vxpose.xlu0.b32.cont [13/16] 0.0, 128
    %1892 = vxpose.xlu0.b32.cont [14/16] 0.0, 128
    %1893 = vxpose.xlu0.b32.cont [15/16] 0.0, 128
    %1894 = vxpose.xlu0.b32.end [16/16] 0.0, 128
    %v1895 = vpop.trf.xlu0
    %v1896 = vpop.trf.xlu0
    %v1897 = vpop.trf.xlu0
    %v1898 = vpop.trf.xlu0
    %v1899 = vpop.trf.xlu0
    %v1900 = vpop.trf.xlu0
    %v1901 = vpop.trf.xlu0
    %v1902 = vpop.trf.xlu0
    %v1903 = vpop.trf.xlu0
    %v1904 = vpop.trf.xlu0
    %v1905 = vpop.trf.xlu0
    %v1906 = vpop.trf.xlu0
    %v1907 = vpop.trf.xlu0
    %v1908 = vpop.trf.xlu0
    %v1909 = vpop.trf.xlu0
    %v1910 = vpop.trf.xlu0
    %1911 = vxpose.xlu0.b32.start [1/16] %v658, 128
    %1912 = vxpose.xlu0.b32.cont [2/16] %v661, 128
    %1913 = vxpose.xlu0.b32.cont [3/16] 0.0, 128
    %1914 = vxpose.xlu0.b32.cont [4/16] 0.0, 128
    %1915 = vxpose.xlu0.b32.cont [5/16] 0.0, 128
    %1916 = vxpose.xlu0.b32.cont [6/16] 0.0, 128
    %1917 = vxpose.xlu0.b32.cont [7/16] 0.0, 128
    %1918 = vxpose.xlu0.b32.cont [8/16] 0.0, 128
    %1919 = vxpose.xlu0.b32.cont [9/16] 0.0, 128
    %1920 = vxpose.xlu0.b32.cont [10/16] 0.0, 128
    %1921 = vxpose.xlu0.b32.cont [11/16] 0.0, 128
    %1922 = vxpose.xlu0.b32.cont [12/16] 0.0, 128
    %1923 = vxpose.xlu0.b32.cont [13/16] 0.0, 128
    %1924 = vxpose.xlu0.b32.cont [14/16] 0.0, 128
    %1925 = vxpose.xlu0.b32.cont [15/16] 0.0, 128
    %1926 = vxpose.xlu0.b32.end [16/16] 0.0, 128
    %v1927 = vpop.trf.xlu0
    %v1928 = vpop.trf.xlu0
    %v1929 = vpop.trf.xlu0
    %v1930 = vpop.trf.xlu0
    %v1931 = vpop.trf.xlu0
    %v1932 = vpop.trf.xlu0
    %v1933 = vpop.trf.xlu0
    %v1934 = vpop.trf.xlu0
    %v1935 = vpop.trf.xlu0
    %v1936 = vpop.trf.xlu0
    %v1937 = vpop.trf.xlu0
    %v1938 = vpop.trf.xlu0
    %v1939 = vpop.trf.xlu0
    %v1940 = vpop.trf.xlu0
    %v1941 = vpop.trf.xlu0
    %v1942 = vpop.trf.xlu0
    %v1944 = vsel %vm165, %v679, 0
    %v1947 = vsel %vm165, %v680, 0
    %v1950 = vsel %vm165, %v711, 0
    %v1953 = vsel %vm165, %v712, 0
    %v1956 = vsel %vm165, %v743, 0
    %v1959 = vsel %vm165, %v744, 0
    %v1962 = vsel %vm165, %v775, 0
    %v1965 = vsel %vm165, %v776, 0
    %v1968 = vsel %vm165, %v807, 0
    %v1971 = vsel %vm165, %v808, 0
    %v1974 = vsel %vm165, %v839, 0
    %v1977 = vsel %vm165, %v840, 0
    %v1980 = vsel %vm165, %v871, 0
    %v1983 = vsel %vm165, %v872, 0
    %v1986 = vsel %vm165, %v903, 0
    %v1989 = vsel %vm165, %v904, 0
    %v1992 = vsel %vm165, %v935, 0
    %v1995 = vsel %vm165, %v936, 0
    %v1998 = vsel %vm165, %v967, 0
    %v2001 = vsel %vm165, %v968, 0
    %v2004 = vsel %vm165, %v999, 0
    %v2007 = vsel %vm165, %v1000, 0
    %v2010 = vsel %vm165, %v1031, 0
    %v2013 = vsel %vm165, %v1032, 0
    %v2016 = vsel %vm165, %v1063, 0
    %v2019 = vsel %vm165, %v1064, 0
    %v2022 = vsel %vm165, %v1095, 0
    %v2025 = vsel %vm165, %v1096, 0
    %v2028 = vsel %vm165, %v1127, 0
    %v2031 = vsel %vm165, %v1128, 0
    %v2034 = vsel %vm165, %v1159, 0
    %v2037 = vsel %vm165, %v1160, 0
    %v2040 = vsel %vm165, %v1191, 0
    %v2043 = vsel %vm165, %v1192, 0
    %v2046 = vsel %vm165, %v1223, 0
    %v2049 = vsel %vm165, %v1224, 0
    %v2052 = vsel %vm165, %v1255, 0
    %v2055 = vsel %vm165, %v1256, 0
    %v2058 = vsel %vm165, %v1287, 0
    %v2061 = vsel %vm165, %v1288, 0
    %v2064 = vsel %vm165, %v1319, 0
    %v2067 = vsel %vm165, %v1320, 0
    %v2070 = vsel %vm165, %v1351, 0
    %v2073 = vsel %vm165, %v1352, 0
    %v2076 = vsel %vm165, %v1383, 0
    %v2079 = vsel %vm165, %v1384, 0
    %v2082 = vsel %vm165, %v1415, 0
    %v2085 = vsel %vm165, %v1416, 0
    %v2088 = vsel %vm165, %v1447, 0
    %v2091 = vsel %vm165, %v1448, 0
    %v2094 = vsel %vm165, %v1479, 0
    %v2097 = vsel %vm165, %v1480, 0
    %v2100 = vsel %vm165, %v1511, 0
    %v2103 = vsel %vm165, %v1512, 0
    %v2106 = vsel %vm165, %v1543, 0
    %v2109 = vsel %vm165, %v1544, 0
    %v2112 = vsel %vm165, %v1575, 0
    %v2115 = vsel %vm165, %v1576, 0
    %v2118 = vsel %vm165, %v1607, 0
    %v2121 = vsel %vm165, %v1608, 0
    %v2124 = vsel %vm165, %v1639, 0
    %v2127 = vsel %vm165, %v1640, 0
    %v2130 = vsel %vm165, %v1671, 0
    %v2133 = vsel %vm165, %v1672, 0
    %v2136 = vsel %vm165, %v1703, 0
    %v2139 = vsel %vm165, %v1704, 0
    %v2142 = vsel %vm165, %v1735, 0
    %v2145 = vsel %vm165, %v1736, 0
    %v2148 = vsel %vm165, %v1767, 0
    %v2151 = vsel %vm165, %v1768, 0
    %v2154 = vsel %vm165, %v1799, 0
    %v2157 = vsel %vm165, %v1800, 0
    %v2160 = vsel %vm165, %v1831, 0
    %v2163 = vsel %vm165, %v1832, 0
    %v2166 = vsel %vm165, %v1863, 0
    %v2169 = vsel %vm165, %v1864, 0
    %v2172 = vsel %vm165, %v1895, 0
    %v2175 = vsel %vm165, %v1896, 0
    %v2178 = vsel %vm165, %v1927, 0
    %v2181 = vsel %vm165, %v1928, 0
    %2183 = vmatpush.msra.mxu0 0.0
    %2184 = vmatpush.msra.mxu0 0.0
    %2185 = vmatpush.msra.mxu0 0.0
    %2186 = vmatpush.msra.mxu0 0.0
    %2187 = vmatpush.msra.mxu0 0.0
    %2188 = vmatpush.msra.mxu0 0.0
    %2189 = vmatpush.msra.mxu0 0.0
    %2190 = vmatpush.msra.mxu0 0.0
    %2191 = vmatpush.msra.mxu0 0.0
    %2192 = vmatpush.msra.mxu0 0.0
    %2193 = vmatpush.msra.mxu0 0.0
    %2194 = vmatpush.msra.mxu0 0.0
    %2195 = vmatpush.msra.mxu0 0.0
    %2196 = vmatpush.msra.mxu0 0.0
    %2197 = vmatpush.msra.mxu0 %v84
    %2198 = vmatpush.msra.mxu0 %v83
    %2199 = vmatmul.f32.gmra.mxu0 %v1944
    %v2200 = vpop.f32.mrf.mxu0
    %v2201 = vadd.f32 0.0, %v2200
    %2202 = vmatmul.f32.gmra.mxu0 %v1947
    %v2203 = vpop.f32.mrf.mxu0
    %v2204 = vadd.f32 0.0, %v2203
    %2205 = vmatmul.f32.gmra.mxu0 %v1950
    %v2206 = vpop.f32.mrf.mxu0
    %v2207 = vadd.f32 0.0, %v2206
    %2208 = vmatmul.f32.gmra.mxu0 %v1953
    %v2209 = vpop.f32.mrf.mxu0
    %v2210 = vadd.f32 0.0, %v2209
    %2211 = vmatmul.f32.gmra.mxu0 %v1956
    %v2212 = vpop.f32.mrf.mxu0
    %v2213 = vadd.f32 0.0, %v2212
    %2214 = vmatmul.f32.gmra.mxu0 %v1959
    %v2215 = vpop.f32.mrf.mxu0
    %v2216 = vadd.f32 0.0, %v2215
    %2217 = vmatmul.f32.gmra.mxu0 %v1962
    %v2218 = vpop.f32.mrf.mxu0
    %v2219 = vadd.f32 0.0, %v2218
    %2220 = vmatmul.f32.gmra.mxu0 %v1965
    %v2221 = vpop.f32.mrf.mxu0
    %v2222 = vadd.f32 0.0, %v2221
    %2223 = vmatmul.f32.gmra.mxu0 %v1968
    %v2224 = vpop.f32.mrf.mxu0
    %v2225 = vadd.f32 0.0, %v2224
    %2226 = vmatmul.f32.gmra.mxu0 %v1971
    %v2227 = vpop.f32.mrf.mxu0
    %v2228 = vadd.f32 0.0, %v2227
    %2229 = vmatmul.f32.gmra.mxu0 %v1974
    %v2230 = vpop.f32.mrf.mxu0
    %v2231 = vadd.f32 0.0, %v2230
    %2232 = vmatmul.f32.gmra.mxu0 %v1977
    %v2233 = vpop.f32.mrf.mxu0
    %v2234 = vadd.f32 0.0, %v2233
    %2235 = vmatmul.f32.gmra.mxu0 %v1980
    %v2236 = vpop.f32.mrf.mxu0
    %v2237 = vadd.f32 0.0, %v2236
    %2238 = vmatmul.f32.gmra.mxu0 %v1983
    %v2239 = vpop.f32.mrf.mxu0
    %v2240 = vadd.f32 0.0, %v2239
    %2241 = vmatmul.f32.gmra.mxu0 %v1986
    %v2242 = vpop.f32.mrf.mxu0
    %v2243 = vadd.f32 0.0, %v2242
    %2244 = vmatmul.f32.gmra.mxu0 %v1989
    %v2245 = vpop.f32.mrf.mxu0
    %v2246 = vadd.f32 0.0, %v2245
    %2247 = vmatmul.f32.gmra.mxu0 %v1992
    %v2248 = vpop.f32.mrf.mxu0
    %v2249 = vadd.f32 0.0, %v2248
    %2250 = vmatmul.f32.gmra.mxu0 %v1995
    %v2251 = vpop.f32.mrf.mxu0
    %v2252 = vadd.f32 0.0, %v2251
    %2253 = vmatmul.f32.gmra.mxu0 %v1998
    %v2254 = vpop.f32.mrf.mxu0
    %v2255 = vadd.f32 0.0, %v2254
    %2256 = vmatmul.f32.gmra.mxu0 %v2001
    %v2257 = vpop.f32.mrf.mxu0
    %v2258 = vadd.f32 0.0, %v2257
    %2259 = vmatmul.f32.gmra.mxu0 %v2004
    %v2260 = vpop.f32.mrf.mxu0
    %v2261 = vadd.f32 0.0, %v2260
    %2262 = vmatmul.f32.gmra.mxu0 %v2007
    %v2263 = vpop.f32.mrf.mxu0
    %v2264 = vadd.f32 0.0, %v2263
    %2265 = vmatmul.f32.gmra.mxu0 %v2010
    %v2266 = vpop.f32.mrf.mxu0
    %v2267 = vadd.f32 0.0, %v2266
    %2268 = vmatmul.f32.gmra.mxu0 %v2013
    %v2269 = vpop.f32.mrf.mxu0
    %v2270 = vadd.f32 0.0, %v2269
    %2271 = vmatmul.f32.gmra.mxu0 %v2016
    %v2272 = vpop.f32.mrf.mxu0
    %v2273 = vadd.f32 0.0, %v2272
    %2274 = vmatmul.f32.gmra.mxu0 %v2019
    %v2275 = vpop.f32.mrf.mxu0
    %v2276 = vadd.f32 0.0, %v2275
    %2277 = vmatmul.f32.gmra.mxu0 %v2022
    %v2278 = vpop.f32.mrf.mxu0
    %v2279 = vadd.f32 0.0, %v2278
    %2280 = vmatmul.f32.gmra.mxu0 %v2025
    %v2281 = vpop.f32.mrf.mxu0
    %v2282 = vadd.f32 0.0, %v2281
    %2283 = vmatmul.f32.gmra.mxu0 %v2028
    %v2284 = vpop.f32.mrf.mxu0
    %v2285 = vadd.f32 0.0, %v2284
    %2286 = vmatmul.f32.gmra.mxu0 %v2031
    %v2287 = vpop.f32.mrf.mxu0
    %v2288 = vadd.f32 0.0, %v2287
    %2289 = vmatmul.f32.gmra.mxu0 %v2034
    %v2290 = vpop.f32.mrf.mxu0
    %v2291 = vadd.f32 0.0, %v2290
    %2292 = vmatmul.f32.gmra.mxu0 %v2037
    %v2293 = vpop.f32.mrf.mxu0
    %v2294 = vadd.f32 0.0, %v2293
    %2295 = vmatmul.f32.gmra.mxu0 %v2040
    %v2296 = vpop.f32.mrf.mxu0
    %v2297 = vadd.f32 0.0, %v2296
    %2298 = vmatmul.f32.gmra.mxu0 %v2043
    %v2299 = vpop.f32.mrf.mxu0
    %v2300 = vadd.f32 0.0, %v2299
    %2301 = vmatmul.f32.gmra.mxu0 %v2046
    %v2302 = vpop.f32.mrf.mxu0
    %v2303 = vadd.f32 0.0, %v2302
    %2304 = vmatmul.f32.gmra.mxu0 %v2049
    %v2305 = vpop.f32.mrf.mxu0
    %v2306 = vadd.f32 0.0, %v2305
    %2307 = vmatmul.f32.gmra.mxu0 %v2052
    %v2308 = vpop.f32.mrf.mxu0
    %v2309 = vadd.f32 0.0, %v2308
    %2310 = vmatmul.f32.gmra.mxu0 %v2055
    %v2311 = vpop.f32.mrf.mxu0
    %v2312 = vadd.f32 0.0, %v2311
    %2313 = vmatmul.f32.gmra.mxu0 %v2058
    %v2314 = vpop.f32.mrf.mxu0
    %v2315 = vadd.f32 0.0, %v2314
    %2316 = vmatmul.f32.gmra.mxu0 %v2061
    %v2317 = vpop.f32.mrf.mxu0
    %v2318 = vadd.f32 0.0, %v2317
    %2319 = vmatmul.f32.gmra.mxu0 %v2064
    %v2320 = vpop.f32.mrf.mxu0
    %v2321 = vadd.f32 0.0, %v2320
    %2322 = vmatmul.f32.gmra.mxu0 %v2067
    %v2323 = vpop.f32.mrf.mxu0
    %v2324 = vadd.f32 0.0, %v2323
    %2325 = vmatmul.f32.gmra.mxu0 %v2070
    %v2326 = vpop.f32.mrf.mxu0
    %v2327 = vadd.f32 0.0, %v2326
    %2328 = vmatmul.f32.gmra.mxu0 %v2073
    %v2329 = vpop.f32.mrf.mxu0
    %v2330 = vadd.f32 0.0, %v2329
    %2331 = vmatmul.f32.gmra.mxu0 %v2076
    %v2332 = vpop.f32.mrf.mxu0
    %v2333 = vadd.f32 0.0, %v2332
    %2334 = vmatmul.f32.gmra.mxu0 %v2079
    %v2335 = vpop.f32.mrf.mxu0
    %v2336 = vadd.f32 0.0, %v2335
    %2337 = vmatmul.f32.gmra.mxu0 %v2082
    %v2338 = vpop.f32.mrf.mxu0
    %v2339 = vadd.f32 0.0, %v2338
    %2340 = vmatmul.f32.gmra.mxu0 %v2085
    %v2341 = vpop.f32.mrf.mxu0
    %v2342 = vadd.f32 0.0, %v2341
    %2343 = vmatmul.f32.gmra.mxu0 %v2088
    %v2344 = vpop.f32.mrf.mxu0
    %v2345 = vadd.f32 0.0, %v2344
    %2346 = vmatmul.f32.gmra.mxu0 %v2091
    %v2347 = vpop.f32.mrf.mxu0
    %v2348 = vadd.f32 0.0, %v2347
    %2349 = vmatmul.f32.gmra.mxu0 %v2094
    %v2350 = vpop.f32.mrf.mxu0
    %v2351 = vadd.f32 0.0, %v2350
    %2352 = vmatmul.f32.gmra.mxu0 %v2097
    %v2353 = vpop.f32.mrf.mxu0
    %v2354 = vadd.f32 0.0, %v2353
    %2355 = vmatmul.f32.gmra.mxu0 %v2100
    %v2356 = vpop.f32.mrf.mxu0
    %v2357 = vadd.f32 0.0, %v2356
    %2358 = vmatmul.f32.gmra.mxu0 %v2103
    %v2359 = vpop.f32.mrf.mxu0
    %v2360 = vadd.f32 0.0, %v2359
    %2361 = vmatmul.f32.gmra.mxu0 %v2106
    %v2362 = vpop.f32.mrf.mxu0
    %v2363 = vadd.f32 0.0, %v2362
    %2364 = vmatmul.f32.gmra.mxu0 %v2109
    %v2365 = vpop.f32.mrf.mxu0
    %v2366 = vadd.f32 0.0, %v2365
    %2367 = vmatmul.f32.gmra.mxu0 %v2112
    %v2368 = vpop.f32.mrf.mxu0
    %v2369 = vadd.f32 0.0, %v2368
    %2370 = vmatmul.f32.gmra.mxu0 %v2115
    %v2371 = vpop.f32.mrf.mxu0
    %v2372 = vadd.f32 0.0, %v2371
    %2373 = vmatmul.f32.gmra.mxu0 %v2118
    %v2374 = vpop.f32.mrf.mxu0
    %v2375 = vadd.f32 0.0, %v2374
    %2376 = vmatmul.f32.gmra.mxu0 %v2121
    %v2377 = vpop.f32.mrf.mxu0
    %v2378 = vadd.f32 0.0, %v2377
    %2379 = vmatmul.f32.gmra.mxu0 %v2124
    %v2380 = vpop.f32.mrf.mxu0
    %v2381 = vadd.f32 0.0, %v2380
    %2382 = vmatmul.f32.gmra.mxu0 %v2127
    %v2383 = vpop.f32.mrf.mxu0
    %v2384 = vadd.f32 0.0, %v2383
    %2385 = vmatmul.f32.gmra.mxu0 %v2130
    %v2386 = vpop.f32.mrf.mxu0
    %v2387 = vadd.f32 0.0, %v2386
    %2388 = vmatmul.f32.gmra.mxu0 %v2133
    %v2389 = vpop.f32.mrf.mxu0
    %v2390 = vadd.f32 0.0, %v2389
    %2391 = vmatmul.f32.gmra.mxu0 %v2136
    %v2392 = vpop.f32.mrf.mxu0
    %v2393 = vadd.f32 0.0, %v2392
    %2394 = vmatmul.f32.gmra.mxu0 %v2139
    %v2395 = vpop.f32.mrf.mxu0
    %v2396 = vadd.f32 0.0, %v2395
    %2397 = vmatmul.f32.gmra.mxu0 %v2142
    %v2398 = vpop.f32.mrf.mxu0
    %v2399 = vadd.f32 0.0, %v2398
    %2400 = vmatmul.f32.gmra.mxu0 %v2145
    %v2401 = vpop.f32.mrf.mxu0
    %v2402 = vadd.f32 0.0, %v2401
    %2403 = vmatmul.f32.gmra.mxu0 %v2148
    %v2404 = vpop.f32.mrf.mxu0
    %v2405 = vadd.f32 0.0, %v2404
    %2406 = vmatmul.f32.gmra.mxu0 %v2151
    %v2407 = vpop.f32.mrf.mxu0
    %v2408 = vadd.f32 0.0, %v2407
    %2409 = vmatmul.f32.gmra.mxu0 %v2154
    %v2410 = vpop.f32.mrf.mxu0
    %v2411 = vadd.f32 0.0, %v2410
    %2412 = vmatmul.f32.gmra.mxu0 %v2157
    %v2413 = vpop.f32.mrf.mxu0
    %v2414 = vadd.f32 0.0, %v2413
    %2415 = vmatmul.f32.gmra.mxu0 %v2160
    %v2416 = vpop.f32.mrf.mxu0
    %v2417 = vadd.f32 0.0, %v2416
    %2418 = vmatmul.f32.gmra.mxu0 %v2163
    %v2419 = vpop.f32.mrf.mxu0
    %v2420 = vadd.f32 0.0, %v2419
    %2421 = vmatmul.f32.gmra.mxu0 %v2166
    %v2422 = vpop.f32.mrf.mxu0
    %v2423 = vadd.f32 0.0, %v2422
    %2424 = vmatmul.f32.gmra.mxu0 %v2169
    %v2425 = vpop.f32.mrf.mxu0
    %v2426 = vadd.f32 0.0, %v2425
    %2427 = vmatmul.f32.gmra.mxu0 %v2172
    %v2428 = vpop.f32.mrf.mxu0
    %v2429 = vadd.f32 0.0, %v2428
    %2430 = vmatmul.f32.gmra.mxu0 %v2175
    %v2431 = vpop.f32.mrf.mxu0
    %v2432 = vadd.f32 0.0, %v2431
    %2433 = vmatmul.f32.gmra.mxu0 %v2178
    %v2434 = vpop.f32.mrf.mxu0
    %v2435 = vadd.f32 0.0, %v2434
    %2436 = vmatmul.f32.gmra.mxu0 %v2181
    %v2437 = vpop.f32.mrf.mxu0
    %v2438 = vadd.f32 0.0, %v2437
    %2439 = vdwg.mxu0
    %v2440 = vmul.f32 %v2201, %v2201
    %v2441 = vmul.f32 %v2204, %v2204
    %v2442 = vmul.f32 %v2207, %v2207
    %v2443 = vmul.f32 %v2210, %v2210
    %v2444 = vmul.f32 %v2213, %v2213
    %v2445 = vmul.f32 %v2216, %v2216
    %v2446 = vmul.f32 %v2219, %v2219
    %v2447 = vmul.f32 %v2222, %v2222
    %v2448 = vmul.f32 %v2225, %v2225
    %v2449 = vmul.f32 %v2228, %v2228
    %v2450 = vmul.f32 %v2231, %v2231
    %v2451 = vmul.f32 %v2234, %v2234
    %v2452 = vmul.f32 %v2237, %v2237
    %v2453 = vmul.f32 %v2240, %v2240
    %v2454 = vmul.f32 %v2243, %v2243
    %v2455 = vmul.f32 %v2246, %v2246
    %v2456 = vmul.f32 %v2249, %v2249
    %v2457 = vmul.f32 %v2252, %v2252
    %v2458 = vmul.f32 %v2255, %v2255
    %v2459 = vmul.f32 %v2258, %v2258
    %v2460 = vmul.f32 %v2261, %v2261
    %v2461 = vmul.f32 %v2264, %v2264
    %v2462 = vmul.f32 %v2267, %v2267
    %v2463 = vmul.f32 %v2270, %v2270
    %v2464 = vmul.f32 %v2273, %v2273
    %v2465 = vmul.f32 %v2276, %v2276
    %v2466 = vmul.f32 %v2279, %v2279
    %v2467 = vmul.f32 %v2282, %v2282
    %v2468 = vmul.f32 %v2285, %v2285
    %v2469 = vmul.f32 %v2288, %v2288
    %v2470 = vmul.f32 %v2291, %v2291
    %v2471 = vmul.f32 %v2294, %v2294
    %v2472 = vmul.f32 %v2201, %v2249
    %v2473 = vmul.f32 %v2204, %v2252
    %v2474 = vmul.f32 %v2207, %v2255
    %v2475 = vmul.f32 %v2210, %v2258
    %v2476 = vmul.f32 %v2213, %v2261
    %v2477 = vmul.f32 %v2216, %v2264
    %v2478 = vmul.f32 %v2219, %v2267
    %v2479 = vmul.f32 %v2222, %v2270
    %v2480 = vmul.f32 %v2225, %v2273
    %v2481 = vmul.f32 %v2228, %v2276
    %v2482 = vmul.f32 %v2231, %v2279
    %v2483 = vmul.f32 %v2234, %v2282
    %v2484 = vmul.f32 %v2237, %v2285
    %v2485 = vmul.f32 %v2240, %v2288
    %v2486 = vmul.f32 %v2243, %v2291
    %v2487 = vmul.f32 %v2246, %v2294
    %v2488 = vsub.f32 %v2297, %v2440
    %v2489 = vsub.f32 %v2300, %v2441
    %v2490 = vsub.f32 %v2303, %v2442
    %v2491 = vsub.f32 %v2306, %v2443
    %v2492 = vsub.f32 %v2309, %v2444
    %v2493 = vsub.f32 %v2312, %v2445
    %v2494 = vsub.f32 %v2315, %v2446
    %v2495 = vsub.f32 %v2318, %v2447
    %v2496 = vsub.f32 %v2321, %v2448
    %v2497 = vsub.f32 %v2324, %v2449
    %v2498 = vsub.f32 %v2327, %v2450
    %v2499 = vsub.f32 %v2330, %v2451
    %v2500 = vsub.f32 %v2333, %v2452
    %v2501 = vsub.f32 %v2336, %v2453
    %v2502 = vsub.f32 %v2339, %v2454
    %v2503 = vsub.f32 %v2342, %v2455
    %v2504 = vsub.f32 %v2345, %v2456
    %v2505 = vsub.f32 %v2348, %v2457
    %v2506 = vsub.f32 %v2351, %v2458
    %v2507 = vsub.f32 %v2354, %v2459
    %v2508 = vsub.f32 %v2357, %v2460
    %v2509 = vsub.f32 %v2360, %v2461
    %v2510 = vsub.f32 %v2363, %v2462
    %v2511 = vsub.f32 %v2366, %v2463
    %v2512 = vsub.f32 %v2369, %v2464
    %v2513 = vsub.f32 %v2372, %v2465
    %v2514 = vsub.f32 %v2375, %v2466
    %v2515 = vsub.f32 %v2378, %v2467
    %v2516 = vsub.f32 %v2381, %v2468
    %v2517 = vsub.f32 %v2384, %v2469
    %v2518 = vsub.f32 %v2387, %v2470
    %v2519 = vsub.f32 %v2390, %v2471
    %v2520 = vsub.f32 %v2393, %v2472
    %v2521 = vsub.f32 %v2396, %v2473
    %v2522 = vsub.f32 %v2399, %v2474
    %v2523 = vsub.f32 %v2402, %v2475
    %v2524 = vsub.f32 %v2405, %v2476
    %v2525 = vsub.f32 %v2408, %v2477
    %v2526 = vsub.f32 %v2411, %v2478
    %v2527 = vsub.f32 %v2414, %v2479
    %v2528 = vsub.f32 %v2417, %v2480
    %v2529 = vsub.f32 %v2420, %v2481
    %v2530 = vsub.f32 %v2423, %v2482
    %v2531 = vsub.f32 %v2426, %v2483
    %v2532 = vsub.f32 %v2429, %v2484
    %v2533 = vsub.f32 %v2432, %v2485
    %v2534 = vsub.f32 %v2435, %v2486
    %v2535 = vsub.f32 %v2438, %v2487
    %v2536 = vmul.f32 %v2472, 2.0
    %v2537 = vmul.f32 %v2473, 2.0
    %v2538 = vmul.f32 %v2474, 2.0
    %v2539 = vmul.f32 %v2475, 2.0
    %v2540 = vmul.f32 %v2476, 2.0
    %v2541 = vmul.f32 %v2477, 2.0
    %v2542 = vmul.f32 %v2478, 2.0
    %v2543 = vmul.f32 %v2479, 2.0
    %v2544 = vmul.f32 %v2480, 2.0
    %v2545 = vmul.f32 %v2481, 2.0
    %v2546 = vmul.f32 %v2482, 2.0
    %v2547 = vmul.f32 %v2483, 2.0
    %v2548 = vmul.f32 %v2484, 2.0
    %v2549 = vmul.f32 %v2485, 2.0
    %v2550 = vmul.f32 %v2486, 2.0
    %v2551 = vmul.f32 %v2487, 2.0
    %v2552 = vadd.f32 %v2536, 0.0001
    %v2553 = vadd.f32 %v2537, 0.0001
    %v2554 = vadd.f32 %v2538, 0.0001
    %v2555 = vadd.f32 %v2539, 0.0001
    %v2556 = vadd.f32 %v2540, 0.0001
    %v2557 = vadd.f32 %v2541, 0.0001
    %v2558 = vadd.f32 %v2542, 0.0001
    %v2559 = vadd.f32 %v2543, 0.0001
    %v2560 = vadd.f32 %v2544, 0.0001
    %v2561 = vadd.f32 %v2545, 0.0001
    %v2562 = vadd.f32 %v2546, 0.0001
    %v2563 = vadd.f32 %v2547, 0.0001
    %v2564 = vadd.f32 %v2548, 0.0001
    %v2565 = vadd.f32 %v2549, 0.0001
    %v2566 = vadd.f32 %v2550, 0.0001
    %v2567 = vadd.f32 %v2551, 0.0001
    %v2568 = vmul.f32 %v2520, 2.0
    %v2569 = vmul.f32 %v2521, 2.0
    %v2570 = vmul.f32 %v2522, 2.0
    %v2571 = vmul.f32 %v2523, 2.0
    %v2572 = vmul.f32 %v2524, 2.0
    %v2573 = vmul.f32 %v2525, 2.0
    %v2574 = vmul.f32 %v2526, 2.0
    %v2575 = vmul.f32 %v2527, 2.0
    %v2576 = vmul.f32 %v2528, 2.0
    %v2577 = vmul.f32 %v2529, 2.0
    %v2578 = vmul.f32 %v2530, 2.0
    %v2579 = vmul.f32 %v2531, 2.0
    %v2580 = vmul.f32 %v2532, 2.0
    %v2581 = vmul.f32 %v2533, 2.0
    %v2582 = vmul.f32 %v2534, 2.0
    %v2583 = vmul.f32 %v2535, 2.0
    %v2584 = vadd.f32 %v2568, 0.0009
    %v2585 = vadd.f32 %v2569, 0.0009
    %v2586 = vadd.f32 %v2570, 0.0009
    %v2587 = vadd.f32 %v2571, 0.0009
    %v2588 = vadd.f32 %v2572, 0.0009
    %v2589 = vadd.f32 %v2573, 0.0009
    %v2590 = vadd.f32 %v2574, 0.0009
    %v2591 = vadd.f32 %v2575, 0.0009
    %v2592 = vadd.f32 %v2576, 0.0009
    %v2593 = vadd.f32 %v2577, 0.0009
    %v2594 = vadd.f32 %v2578, 0.0009
    %v2595 = vadd.f32 %v2579, 0.0009
    %v2596 = vadd.f32 %v2580, 0.0009
    %v2597 = vadd.f32 %v2581, 0.0009
    %v2598 = vadd.f32 %v2582, 0.0009
    %v2599 = vadd.f32 %v2583, 0.0009
    %v2600 = vmul.f32 %v2552, %v2584
    %v2601 = vmul.f32 %v2553, %v2585
    %v2602 = vmul.f32 %v2554, %v2586
    %v2603 = vmul.f32 %v2555, %v2587
    %v2604 = vmul.f32 %v2556, %v2588
    %v2605 = vmul.f32 %v2557, %v2589
    %v2606 = vmul.f32 %v2558, %v2590
    %v2607 = vmul.f32 %v2559, %v2591
    %v2608 = vmul.f32 %v2560, %v2592
    %v2609 = vmul.f32 %v2561, %v2593
    %v2610 = vmul.f32 %v2562, %v2594
    %v2611 = vmul.f32 %v2563, %v2595
    %v2612 = vmul.f32 %v2564, %v2596
    %v2613 = vmul.f32 %v2565, %v2597
    %v2614 = vmul.f32 %v2566, %v2598
    %v2615 = vmul.f32 %v2567, %v2599
    %v2616 = vadd.f32 %v2440, %v2456
    %v2617 = vadd.f32 %v2441, %v2457
    %v2618 = vadd.f32 %v2442, %v2458
    %v2619 = vadd.f32 %v2443, %v2459
    %v2620 = vadd.f32 %v2444, %v2460
    %v2621 = vadd.f32 %v2445, %v2461
    %v2622 = vadd.f32 %v2446, %v2462
    %v2623 = vadd.f32 %v2447, %v2463
    %v2624 = vadd.f32 %v2448, %v2464
    %v2625 = vadd.f32 %v2449, %v2465
    %v2626 = vadd.f32 %v2450, %v2466
    %v2627 = vadd.f32 %v2451, %v2467
    %v2628 = vadd.f32 %v2452, %v2468
    %v2629 = vadd.f32 %v2453, %v2469
    %v2630 = vadd.f32 %v2454, %v2470
    %v2631 = vadd.f32 %v2455, %v2471
    %v2632 = vadd.f32 %v2616, 0.0001
    %v2633 = vadd.f32 %v2617, 0.0001
    %v2634 = vadd.f32 %v2618, 0.0001
    %v2635 = vadd.f32 %v2619, 0.0001
    %v2636 = vadd.f32 %v2620, 0.0001
    %v2637 = vadd.f32 %v2621, 0.0001
    %v2638 = vadd.f32 %v2622, 0.0001
    %v2639 = vadd.f32 %v2623, 0.0001
    %v2640 = vadd.f32 %v2624, 0.0001
    %v2641 = vadd.f32 %v2625, 0.0001
    %v2642 = vadd.f32 %v2626, 0.0001
    %v2643 = vadd.f32 %v2627, 0.0001
    %v2644 = vadd.f32 %v2628, 0.0001
    %v2645 = vadd.f32 %v2629, 0.0001
    %v2646 = vadd.f32 %v2630, 0.0001
    %v2647 = vadd.f32 %v2631, 0.0001
    %v2648 = vadd.f32 %v2488, %v2504
    %v2649 = vadd.f32 %v2489, %v2505
    %v2650 = vadd.f32 %v2490, %v2506
    %v2651 = vadd.f32 %v2491, %v2507
    %v2652 = vadd.f32 %v2492, %v2508
    %v2653 = vadd.f32 %v2493, %v2509
    %v2654 = vadd.f32 %v2494, %v2510
    %v2655 = vadd.f32 %v2495, %v2511
    %v2656 = vadd.f32 %v2496, %v2512
    %v2657 = vadd.f32 %v2497, %v2513
    %v2658 = vadd.f32 %v2498, %v2514
    %v2659 = vadd.f32 %v2499, %v2515
    %v2660 = vadd.f32 %v2500, %v2516
    %v2661 = vadd.f32 %v2501, %v2517
    %v2662 = vadd.f32 %v2502, %v2518
    %v2663 = vadd.f32 %v2503, %v2519
    %v2664 = vadd.f32 %v2648, 0.0009
    %v2665 = vadd.f32 %v2649, 0.0009
    %v2666 = vadd.f32 %v2650, 0.0009
    %v2667 = vadd.f32 %v2651, 0.0009
    %v2668 = vadd.f32 %v2652, 0.0009
    %v2669 = vadd.f32 %v2653, 0.0009
    %v2670 = vadd.f32 %v2654, 0.0009
    %v2671 = vadd.f32 %v2655, 0.0009
    %v2672 = vadd.f32 %v2656, 0.0009
    %v2673 = vadd.f32 %v2657, 0.0009
    %v2674 = vadd.f32 %v2658, 0.0009
    %v2675 = vadd.f32 %v2659, 0.0009
    %v2676 = vadd.f32 %v2660, 0.0009
    %v2677 = vadd.f32 %v2661, 0.0009
    %v2678 = vadd.f32 %v2662, 0.0009
    %v2679 = vadd.f32 %v2663, 0.0009
    %v2680 = vmul.f32 %v2632, %v2664
    %v2681 = vmul.f32 %v2633, %v2665
    %v2682 = vmul.f32 %v2634, %v2666
    %v2683 = vmul.f32 %v2635, %v2667
    %v2684 = vmul.f32 %v2636, %v2668
    %v2685 = vmul.f32 %v2637, %v2669
    %v2686 = vmul.f32 %v2638, %v2670
    %v2687 = vmul.f32 %v2639, %v2671
    %v2688 = vmul.f32 %v2640, %v2672
    %v2689 = vmul.f32 %v2641, %v2673
    %v2690 = vmul.f32 %v2642, %v2674
    %v2691 = vmul.f32 %v2643, %v2675
    %v2692 = vmul.f32 %v2644, %v2676
    %v2693 = vmul.f32 %v2645, %v2677
    %v2694 = vmul.f32 %v2646, %v2678
    %v2695 = vmul.f32 %v2647, %v2679
    %v2696 = vrcp.pop %v2680
    %v2697 = vrcp.pop %v2681
    %v2698 = vrcp.pop %v2682
    %v2699 = vrcp.pop %v2683
    %v2700 = vrcp.pop %v2684
    %v2701 = vrcp.pop %v2685
    %v2702 = vrcp.pop %v2686
    %v2703 = vrcp.pop %v2687
    %v2704 = vrcp.pop %v2688
    %v2705 = vrcp.pop %v2689
    %v2706 = vrcp.pop %v2690
    %v2707 = vrcp.pop %v2691
    %v2708 = vrcp.pop %v2692
    %v2709 = vrcp.pop %v2693
    %v2710 = vrcp.pop %v2694
    %v2711 = vrcp.pop %v2695
    %v2712 = vmul.f32 %v2680, %v2696
    %v2713 = vmul.f32 %v2681, %v2697
    %v2714 = vmul.f32 %v2682, %v2698
    %v2715 = vmul.f32 %v2683, %v2699
    %v2716 = vmul.f32 %v2684, %v2700
    %v2717 = vmul.f32 %v2685, %v2701
    %v2718 = vmul.f32 %v2686, %v2702
    %v2719 = vmul.f32 %v2687, %v2703
    %v2720 = vmul.f32 %v2688, %v2704
    %v2721 = vmul.f32 %v2689, %v2705
    %v2722 = vmul.f32 %v2690, %v2706
    %v2723 = vmul.f32 %v2691, %v2707
    %v2724 = vmul.f32 %v2692, %v2708
    %v2725 = vmul.f32 %v2693, %v2709
    %v2726 = vmul.f32 %v2694, %v2710
    %v2727 = vmul.f32 %v2695, %v2711
    %v2728 = vsub.f32 2.0, %v2712
    %v2729 = vsub.f32 2.0, %v2713
    %v2730 = vsub.f32 2.0, %v2714
    %v2731 = vsub.f32 2.0, %v2715
    %v2732 = vsub.f32 2.0, %v2716
    %v2733 = vsub.f32 2.0, %v2717
    %v2734 = vsub.f32 2.0, %v2718
    %v2735 = vsub.f32 2.0, %v2719
    %v2736 = vsub.f32 2.0, %v2720
    %v2737 = vsub.f32 2.0, %v2721
    %v2738 = vsub.f32 2.0, %v2722
    %v2739 = vsub.f32 2.0, %v2723
    %v2740 = vsub.f32 2.0, %v2724
    %v2741 = vsub.f32 2.0, %v2725
    %v2742 = vsub.f32 2.0, %v2726
    %v2743 = vsub.f32 2.0, %v2727
    %v2744 = vmul.f32 %v2696, %v2728
    %v2745 = vmul.f32 %v2697, %v2729
    %v2746 = vmul.f32 %v2698, %v2730
    %v2747 = vmul.f32 %v2699, %v2731
    %v2748 = vmul.f32 %v2700, %v2732
    %v2749 = vmul.f32 %v2701, %v2733
    %v2750 = vmul.f32 %v2702, %v2734
    %v2751 = vmul.f32 %v2703, %v2735
    %v2752 = vmul.f32 %v2704, %v2736
    %v2753 = vmul.f32 %v2705, %v2737
    %v2754 = vmul.f32 %v2706, %v2738
    %v2755 = vmul.f32 %v2707, %v2739
    %v2756 = vmul.f32 %v2708, %v2740
    %v2757 = vmul.f32 %v2709, %v2741
    %v2758 = vmul.f32 %v2710, %v2742
    %v2759 = vmul.f32 %v2711, %v2743
    %v2760 = vmul.f32 %v2600, %v2744
    %v2761 = vmul.f32 %v2601, %v2745
    %v2762 = vmul.f32 %v2602, %v2746
    %v2763 = vmul.f32 %v2603, %v2747
    %v2764 = vmul.f32 %v2604, %v2748
    %v2765 = vmul.f32 %v2605, %v2749
    %v2766 = vmul.f32 %v2606, %v2750
    %v2767 = vmul.f32 %v2607, %v2751
    %v2768 = vmul.f32 %v2608, %v2752
    %v2769 = vmul.f32 %v2609, %v2753
    %v2770 = vmul.f32 %v2610, %v2754
    %v2771 = vmul.f32 %v2611, %v2755
    %v2772 = vmul.f32 %v2612, %v2756
    %v2773 = vmul.f32 %v2613, %v2757
    %v2774 = vmul.f32 %v2614, %v2758
    %v2775 = vmul.f32 %v2615, %v2759
    %v2776 = vsel %vm165, %v2760, 0.0
    %v2777 = vsel %vm165, %v2761, 0.0
    %v2778 = vadd.f32 %v2776, %v2777
    %v2779 = vrot.slane %v2778, 4
    %v2780 = vadd.f32 %v2778, %v2779
    %v2781 = vrot.slane %v2780, 2
    %v2782 = vadd.f32 %v2780, %v2781
    %v2783 = vrot.slane %v2782, 1
    %v2784 = vadd.f32 %v2782, %v2783
    %v2785 = vsel %vm165, %v2762, 0.0
    %v2786 = vsel %vm165, %v2763, 0.0
    %v2787 = vadd.f32 %v2785, %v2786
    %v2788 = vrot.slane %v2787, 4
    %v2789 = vadd.f32 %v2787, %v2788
    %v2790 = vrot.slane %v2789, 2
    %v2791 = vadd.f32 %v2789, %v2790
    %v2792 = vrot.slane %v2791, 1
    %v2793 = vadd.f32 %v2791, %v2792
    %v2794 = vsel %vm165, %v2764, 0.0
    %v2795 = vsel %vm165, %v2765, 0.0
    %v2796 = vadd.f32 %v2794, %v2795
    %v2797 = vrot.slane %v2796, 4
    %v2798 = vadd.f32 %v2796, %v2797
    %v2799 = vrot.slane %v2798, 2
    %v2800 = vadd.f32 %v2798, %v2799
    %v2801 = vrot.slane %v2800, 1
    %v2802 = vadd.f32 %v2800, %v2801
    %v2803 = vsel %vm165, %v2766, 0.0
    %v2804 = vsel %vm165, %v2767, 0.0
    %v2805 = vadd.f32 %v2803, %v2804
    %v2806 = vrot.slane %v2805, 4
    %v2807 = vadd.f32 %v2805, %v2806
    %v2808 = vrot.slane %v2807, 2
    %v2809 = vadd.f32 %v2807, %v2808
    %v2810 = vrot.slane %v2809, 1
    %v2811 = vadd.f32 %v2809, %v2810
    %v2812 = vsel %vm165, %v2768, 0.0
    %v2813 = vsel %vm165, %v2769, 0.0
    %v2814 = vadd.f32 %v2812, %v2813
    %v2815 = vrot.slane %v2814, 4
    %v2816 = vadd.f32 %v2814, %v2815
    %v2817 = vrot.slane %v2816, 2
    %v2818 = vadd.f32 %v2816, %v2817
    %v2819 = vrot.slane %v2818, 1
    %v2820 = vadd.f32 %v2818, %v2819
    %v2821 = vsel %vm165, %v2770, 0.0
    %v2822 = vsel %vm165, %v2771, 0.0
    %v2823 = vadd.f32 %v2821, %v2822
    %v2824 = vrot.slane %v2823, 4
    %v2825 = vadd.f32 %v2823, %v2824
    %v2826 = vrot.slane %v2825, 2
    %v2827 = vadd.f32 %v2825, %v2826
    %v2828 = vrot.slane %v2827, 1
    %v2829 = vadd.f32 %v2827, %v2828
    %v2830 = vsel %vm165, %v2772, 0.0
    %v2831 = vsel %vm165, %v2773, 0.0
    %v2832 = vadd.f32 %v2830, %v2831
    %v2833 = vrot.slane %v2832, 4
    %v2834 = vadd.f32 %v2832, %v2833
    %v2835 = vrot.slane %v2834, 2
    %v2836 = vadd.f32 %v2834, %v2835
    %v2837 = vrot.slane %v2836, 1
    %v2838 = vadd.f32 %v2836, %v2837
    %v2839 = vsel %vm165, %v2774, 0.0
    %v2840 = vsel %vm165, %v2775, 0.0
    %v2841 = vadd.f32 %v2839, %v2840
    %v2842 = vrot.slane %v2841, 4
    %v2843 = vadd.f32 %v2841, %v2842
    %v2844 = vrot.slane %v2843, 2
    %v2845 = vadd.f32 %v2843, %v2844
    %v2846 = vrot.slane %v2845, 1
    %v2847 = vadd.f32 %v2845, %v2846
    %vm2856 = vcmask 1041409
    %v2857 = vsel %vm2856, %v2793, %v2784
    %vm2858 = vcmask 1042434
    %v2859 = vsel %vm2858, %v2802, %v2857
    %vm2860 = vcmask 1043459
    %v2861 = vsel %vm2860, %v2811, %v2859
    %vm2862 = vcmask 1044484
    %v2863 = vsel %vm2862, %v2820, %v2861
    %vm2864 = vcmask 1045509
    %v2865 = vsel %vm2864, %v2829, %v2863
    %vm2866 = vcmask 1046534
    %v2867 = vsel %vm2866, %v2838, %v2865
    %vm2868 = vcmask 1047559
    %v2869 = vsel %vm2868, %v2847, %v2867
    %v2871 = vsel %vm165, %v2869, 0.0
    %2872 = vadd.xlane.f32.xlu0 %v2871
    %v2873 = vpop.xlane.xlu0 %2872
    %v2874 = vmul.f32 %v2873, 0.00390625
    %v2876 = vlaneseq
    %v2877 = vand.u32 %v2876, 127
    %v2878 = vperm.slane %v2874, %v2877
    %vm2880 = vcmask 57344
    %2881 = vst.msk [vmem:[#allocation10] sm:$0x1] %vm2880, %v2878
    // Predicated region
    $region34: #{tpu_custom_call.1} parent=1 // pred_check
      _
    $region35: #{tpu_custom_call.1} parent=1 // pred_check_branch
      %2883 = sbr.rel (0) target = $region37
    $region36: #{tpu_custom_call.1} parent=1 // pred_region
      %2885 = vsyncadd [#allocation4], 0
      %s2887 = sshll.u32 [#allocation10], 4
      %s2888 = int_to_ptr.vmem [resolvable:$true] %s2887
      %s2889 = sshll.u32 %s4, 4
      %s2890 = int_to_ptr.hbm [resolvable:$true] %s2889
      %2892 = dma.vmem_to_hbm [thread:$0]  %s2888, 16, %s2890, [#allocation4]
    $region37: #{tpu_custom_call.1} parent=1 // pred_fallthru
      _
    // Predicated region
    $region38: #{tpu_custom_call.1} parent=1 // pred_check
      _
    $region39: #{tpu_custom_call.1} parent=1 // pred_check_branch
      %2894 = sbr.rel (0) target = $region41
    $region40: #{tpu_custom_call.1} parent=1 // pred_region
      %2896 = dma.done [#allocation4], 16
    $region41: #{tpu_custom_call.1} parent=1 // pred_fallthru
      _
    %2897 = vsyncpa [#allocation3], 1
    %2898 = vsyncpa [#allocation6], 1
    %2899 = vsyncpa [#allocation9], 1
    %2900 = vsyncpa [#allocation4], 1

</llo_original>
